<compile_context>
chip_gen: v6e
topology: v6e:2x2x1
jax: 0.10.0
libtpu: 0.0.40
codegen_flags: <defaults>
</compile_context>

<pallas_src>
import functools

import jax
import jax.numpy as jnp
import numpy as np
from jax.experimental import pallas as pl
from jax.experimental.pallas import tpu as pltpu

HI = jax.lax.Precision.HIGHEST


# ----------------------------- Pallas kernel ------------------------------ #
def _bilstm_block_kernel(lens_ref, g_ref, whh_ref, out_ref, h_sc, c_sc,
                         *, t_blk, t_pad, batch, hidden):
    """Runs T_BLK fused (fwd+bwd) LSTM steps per grid iteration.

    lens_ref : (2B, 1)  int32   sequence lengths (duplicated for both halves)
    g_ref    : (T_BLK, 2B, 4H)  precomputed x@W_ih^T + b; rows 0:B forward at
                                time s*T_BLK+j, rows B:2B backward at time
                                T_pad-1-(s*T_BLK+j)  (already time-flipped)
    whh_ref  : (H, 8H)          [W_hh_f^T | W_hh_b^T]  (256-lane MXU RHS)
    out_ref  : (T_BLK, 2B, H)   hidden outputs (0 past each sequence length)
    h_sc,c_sc: (2B, H)          recurrent state, persists across grid steps
    """
    s = pl.program_id(0)

    @pl.when(s == 0)
    def _():
        h_sc[...] = jnp.zeros_like(h_sc)
        c_sc[...] = jnp.zeros_like(c_sc)

    H = hidden
    B = batch
    row = jax.lax.broadcasted_iota(jnp.int32, (2 * B, 1), 0)
    is_fwd = row < B                       # (2B, 1) bool: which direction per row
    lens = lens_ref[...]                   # (2B, 1) int32

    base = s * t_blk
    # Straight-line unrolled region: T_BLK recurrent steps per grid iteration.
    for j in range(t_blk):
        k = base + j                                       # global step counter
        # forward rows use time k, backward rows use time T_pad-1-k
        t_step = jnp.where(is_fwd, k, t_pad - 1 - k)       # (2B, 1) int32
        m = (t_step < lens).astype(jnp.float32)            # (2B, 1) validity mask

        # Single 256-wide MXU matmul for both directions.
        gg = jnp.dot(h_sc[...], whh_ref[...],
                     preferred_element_type=jnp.float32)   # (2B, 8H)
        # Lane-aligned 128-wide halves; per-row pick of the direction's gates.
        g_hh = jnp.where(is_fwd, gg[:, :4 * H], gg[:, 4 * H:])    # (2B, 4H)
        gates = g_ref[j] + g_hh                                   # (2B, 4H)

        # PyTorch gate ordering: i, f, g, o
        i_g = jax.nn.sigmoid(gates[:, 0 * H:1 * H])
        f_g = jax.nn.sigmoid(gates[:, 1 * H:2 * H])
        g_g = jnp.tanh(gates[:, 2 * H:3 * H])
        o_g = jax.nn.sigmoid(gates[:, 3 * H:4 * H])

        c_new = f_g * c_sc[...] + i_g * g_g
        h_new = o_g * jnp.tanh(c_new)

        # Packed-sequence semantics: freeze state past sequence end, output 0.
        h_sc[...] = m * h_new + (1.0 - m) * h_sc[...]
        c_sc[...] = m * c_new + (1.0 - m) * c_sc[...]
        out_ref[j] = m * h_new


# ----------------------------- module wrapper ------------------------------ #
def init_lstm_params(key, input_size, lstm_h):
    """Deterministic parameter init (PyTorch-style U(-1/sqrt(H), 1/sqrt(H)))."""
    k = 1.0 / np.sqrt(lstm_h)
    keys = jax.random.split(key, 8)

    def u(kk, shape):
        return jax.random.uniform(kk, shape, jnp.float32, minval=-k, maxval=k)

    return {
        "W_ih_f": u(keys[0], (4 * lstm_h, input_size)),
        "W_hh_f": u(keys[1], (4 * lstm_h, lstm_h)),
        "b_ih_f": u(keys[2], (4 * lstm_h,)),
        "b_hh_f": u(keys[3], (4 * lstm_h,)),
        "W_ih_b": u(keys[4], (4 * lstm_h, input_size)),
        "W_hh_b": u(keys[5], (4 * lstm_h, lstm_h)),
        "b_ih_b": u(keys[6], (4 * lstm_h,)),
        "b_hh_b": u(keys[7], (4 * lstm_h,)),
    }


def lstm_forward(params, x, n_wins, t_blk=8):
    """Equivalent of LSTM.forward(x, n_wins): returns (out, n_wins).

    x: (B, T, F) float32, n_wins: (B,) int32.
    out: (B, max(n_wins), 2*H), zero-padded past each sequence length.
    """
    B = x.shape[0]
    F = x.shape[2]
    H = params["W_hh_f"].shape[1]
    # pad_packed total_length; host value (same as PyTorch n_wins.max()).
    t_max = int(np.asarray(n_wins).max())
    t_pad = ((t_max + t_blk - 1) // t_blk) * t_blk
    nt = t_pad // t_blk

    x = x[:, :t_max, :].astype(jnp.float32)
    lens = jnp.asarray(n_wins, jnp.int32)

    # ---- hoisted input projection: one large MXU matmul for both directions ----
    w_ih_packed = jnp.concatenate(
        [params["W_ih_f"].T, params["W_ih_b"].T], axis=1)            # (F, 8H)
    b_packed = jnp.concatenate(
        [params["b_ih_f"] + params["b_hh_f"],
         params["b_ih_b"] + params["b_hh_b"]], axis=0)               # (8H,)
    g = jnp.dot(x.reshape(B * t_max, F), w_ih_packed,
                precision=HI) + b_packed                             # (B*T, 8H)
    g = g.reshape(B, t_max, 8 * H)

    g_f = jnp.transpose(g[..., :4 * H], (1, 0, 2))                   # (T, B, 4H)
    g_b = jnp.transpose(g[..., 4 * H:], (1, 0, 2))                   # (T, B, 4H)
    pad = t_pad - t_max
    if pad:
        zeros = jnp.zeros((pad, B, 4 * H), jnp.float32)
        g_f = jnp.concatenate([g_f, zeros], axis=0)
        g_b = jnp.concatenate([g_b, zeros], axis=0)
    # backward half gets the plain time-flip (masking makes this equivalent to
    # packed-sequence per-length reversal); stack along the batch axis.
    g_all = jnp.concatenate([g_f, g_b[::-1]], axis=1)                # (T_pad, 2B, 4H)

    w_hh_packed = jnp.concatenate(
        [params["W_hh_f"].T, params["W_hh_b"].T], axis=1)            # (H, 8H)
    lens2 = jnp.concatenate([lens, lens], axis=0)[:, None]           # (2B, 1)

    kernel = functools.partial(_bilstm_block_kernel,
                               t_blk=t_blk, t_pad=t_pad, batch=B, hidden=H)

    out_all = pl.pallas_call(
        kernel,
        out_shape=jax.ShapeDtypeStruct((t_pad, 2 * B, H), jnp.float32),
        grid_spec=pltpu.PrefetchScalarGridSpec(
            num_scalar_prefetch=0,
            grid=(nt,),
            in_specs=[
                pl.BlockSpec((2 * B, 1), lambda s: (0, 0)),            # lens
                pl.BlockSpec((t_blk, 2 * B, 4 * H), lambda s: (s, 0, 0)),  # G
                pl.BlockSpec((H, 8 * H), lambda s: (0, 0)),            # W_hh packed
            ],
            out_specs=pl.BlockSpec((t_blk, 2 * B, H), lambda s: (s, 0, 0)),
            scratch_shapes=[pltpu.VMEM((2 * B, H), jnp.float32),       # h
                            pltpu.VMEM((2 * B, H), jnp.float32)],      # c
        ),
        compiler_params=pltpu.CompilerParams(
            dimension_semantics=("arbitrary",)),                       # sequential in time
    )(lens2, g_all, w_hh_packed)

    # un-stack directions; backward half is just a time-flip back (no gather)
    out_f = jnp.transpose(out_all[:t_max, :B, :], (1, 0, 2))           # (B, T, H)
    out_b = jnp.transpose(out_all[::-1][:t_max, B:, :], (1, 0, 2))     # (B, T, H)
    out = jnp.concatenate([out_f, out_b], axis=-1)                     # (B, T, 2H)
    return out, n_wins


# ------------------------------ pure-JAX ref ------------------------------- #
def _ref_direction(x, lens, W_ih, W_hh, b):
    B, T, _ = x.shape
    H = W_hh.shape[1]
    h = jnp.zeros((B, H), jnp.float32)
    c = jnp.zeros((B, H), jnp.float32)
    outs = []
    for t in range(T):
        gates = (jnp.dot(x[:, t, :], W_ih.T, precision=HI)
                 + jnp.dot(h, W_hh.T, precision=HI) + b)
        i_g = jax.nn.sigmoid(gates[:, 0 * H:1 * H])
        f_g = jax.nn.sigmoid(gates[:, 1 * H:2 * H])
        g_g = jnp.tanh(gates[:, 2 * H:3 * H])
        o_g = jax.nn.sigmoid(gates[:, 3 * H:4 * H])
        c_new = f_g * c + i_g * g_g
        h_new = o_g * jnp.tanh(c_new)
        m = (t < lens).astype(jnp.float32)[:, None]
        h = m * h_new + (1.0 - m) * h
        c = m * c_new + (1.0 - m) * c
        outs.append(m * h_new)
    return jnp.stack(outs, axis=1)


def lstm_forward_ref(params, x, n_wins):
    B = x.shape[0]
    t_max = int(np.asarray(n_wins).max())
    x = x[:, :t_max, :]
    T = t_max
    lens = jnp.asarray(n_wins, jnp.int32)
    t_idx = jnp.arange(T, dtype=jnp.int32)
    valid = t_idx[None, :] < lens[:, None]
    mask = valid.astype(jnp.float32)
    out_f = _ref_direction(x, lens, params["W_ih_f"], params["W_hh_f"],
                           params["b_ih_f"] + params["b_hh_f"])
    rev_idx = jnp.where(valid, lens[:, None] - 1 - t_idx[None, :], t_idx[None, :])
    b_idx = jnp.arange(B)[:, None]
    out_b_rev = _ref_direction(x[b_idx, rev_idx], lens,
                               params["W_ih_b"], params["W_hh_b"],
                               params["b_ih_b"] + params["b_hh_b"])
    out_b = out_b_rev[b_idx, rev_idx] * mask[:, :, None]
    return jnp.concatenate([out_f, out_b], axis=-1), n_wins


# ---------------------------------- main ----------------------------------- #
if __name__ == "__main__":
    B, T, INPUT_SIZE, LSTM_H = 2, 12, 16, 32

    key = jax.random.PRNGKey(0)
    k_par, k_x = jax.random.split(key)
    params = init_lstm_params(k_par, INPUT_SIZE, LSTM_H)

    x = jax.random.normal(k_x, (B, T, INPUT_SIZE), jnp.float32)
    n_wins = jnp.array([12, 7], dtype=jnp.int32)

    # t_blk=8 with T=12 -> T_pad=16, grid of 2: exercises both the time padding
    # path and the state carry across grid steps.
    out, n_out = lstm_forward(params, x, n_wins, t_blk=8)
    out = jax.block_until_ready(out)

    # sanity: shape, zero padding past lengths, match pure-JAX reference
    t_max = int(np.asarray(n_wins).max())
    assert out.shape == (B, t_max, 2 * LSTM_H)
    assert bool(jnp.all(out[1, int(n_wins[1]):, :] == 0.0))
    out_ref, _ = lstm_forward_ref(params, x, n_wins)
    np.testing.assert_allclose(np.asarray(out), np.asarray(out_ref),
                               rtol=1e-4, atol=1e-5)

    print("KERNEL_OK")
</pallas_src>

<mosaic_0001>
module attributes {stable_mosaic.version = 11 : i64} {
  func.func @_bilstm_block_kernel(%arg0: i32, %arg1: memref<4x1xi32, #tpu.memory_space<vmem>>, %arg2: memref<8x4x128xf32, #tpu.memory_space<vmem>>, %arg3: memref<32x256xf32, #tpu.memory_space<vmem>>, %arg4: memref<8x4x32xf32, #tpu.memory_space<vmem>>, %arg5: memref<4x32xf32, #tpu.memory_space<vmem>>, %arg6: memref<4x32xf32, #tpu.memory_space<vmem>>) attributes {dimension_semantics = [#tpu.dimension_semantics<arbitrary>], iteration_bounds = array<i64: 2>, scalar_prefetch = 0 : i64, scratch_operands = 2 : i64, tpu.core_type = #tpu.core_type<tc>, window_params = [{pipeline_mode = #tpu.pipeline_mode<synchronous>, transform_indices = @transform_0, window_bounds = array<i64: 4, 1>}, {transform_indices = @transform_1, window_bounds = array<i64: 8, 4, 128>}, {pipeline_mode = #tpu.pipeline_mode<synchronous>, transform_indices = @transform_2, window_bounds = array<i64: 32, 256>}, {transform_indices = @transform_3, window_bounds = array<i64: 8, 4, 32>}]} {
    %c0_i32 = arith.constant 0 : i32
    %0 = arith.cmpi eq, %arg0, %c0_i32 : i32
    %1 = arith.extui %0 : i1 to i32
    %c0_i32_0 = arith.constant 0 : i32
    %2 = arith.cmpi ne, %1, %c0_i32_0 : i32
    scf.if %2 {
      %cst_211 = arith.constant 0.000000e+00 : f32
      %552 = vector.broadcast %cst_211 : f32 to vector<4x32xf32>
      %c0_212 = arith.constant 0 : index
      %c0_213 = arith.constant 0 : index
      %553 = vector.load %arg5[%c0_212, %c0_213] : memref<4x32xf32, #tpu.memory_space<vmem>>, vector<4x32xf32>
      tpu.vector_store %arg5[%c0_212, %c0_213], %552 {strides = array<i32>} : memref<4x32xf32, #tpu.memory_space<vmem>>, vector<4x32xf32>,
      %cst_214 = arith.constant 0.000000e+00 : f32
      %554 = vector.broadcast %cst_214 : f32 to vector<4x32xf32>
      %c0_215 = arith.constant 0 : index
      %c0_216 = arith.constant 0 : index
      %555 = vector.load %arg6[%c0_215, %c0_216] : memref<4x32xf32, #tpu.memory_space<vmem>>, vector<4x32xf32>
      tpu.vector_store %arg6[%c0_215, %c0_216], %554 {strides = array<i32>} : memref<4x32xf32, #tpu.memory_space<vmem>>, vector<4x32xf32>,
    } else {
    }
    %3 = tpu.iota {dimensions = array<i32: 0>} : vector<4x1xi32>
    %c2_i32 = arith.constant 2 : i32
    %4 = vector.broadcast %c2_i32 : i32 to vector<4x1xi32>
    %5 = arith.cmpi slt, %3, %4 : vector<4x1xi32>
    %c0 = arith.constant 0 : index
    %c0_1 = arith.constant 0 : index
    %6 = vector.load %arg1[%c0, %c0_1] : memref<4x1xi32, #tpu.memory_space<vmem>>, vector<4x1xi32>
    %c8_i32 = arith.constant 8 : i32
    %7 = arith.muli %arg0, %c8_i32 : i32
    %c0_i32_2 = arith.constant 0 : i32
    %8 = arith.addi %7, %c0_i32_2 : i32
    %c15_i32 = arith.constant 15 : i32
    %9 = arith.subi %c15_i32, %8 : i32
    %10 = vector.broadcast %8 : i32 to vector<4x1xi32>
    %11 = vector.broadcast %9 : i32 to vector<4x1xi32>
    %12 = arith.select %5, %10, %11 : vector<4x1xi1>, vector<4x1xi32>
    %13 = arith.cmpi slt, %12, %6 : vector<4x1xi32>
    %14 = arith.extui %13 : vector<4x1xi1> to vector<4x1xi32>
    %15 = arith.sitofp %14 : vector<4x1xi32> to vector<4x1xf32>
    %c0_3 = arith.constant 0 : index
    %c0_4 = arith.constant 0 : index
    %16 = vector.load %arg5[%c0_3, %c0_4] : memref<4x32xf32, #tpu.memory_space<vmem>>, vector<4x32xf32>
    %c0_5 = arith.constant 0 : index
    %c0_6 = arith.constant 0 : index
    %17 = vector.load %arg3[%c0_5, %c0_6] : memref<32x256xf32, #tpu.memory_space<vmem>>, vector<32x256xf32>
    %cst = arith.constant dense<0.000000e+00> : vector<4x256xf32>
    %18 = tpu.matmul %16, %17, %cst {dimension_numbers = #tpu.dot_dimension_numbers<[1], [0], [0], [1], [0, 0, 1, 1], [], []>} : vector<4x32xf32>, vector<32x256xf32>, vector<4x256xf32> -> vector<4x256xf32>
    %19 = vector.extract_strided_slice %18 {offsets = [0, 0], sizes = [4, 128], strides = [1, 1]} : vector<4x256xf32> to vector<4x128xf32>
    %20 = vector.extract_strided_slice %18 {offsets = [0, 128], sizes = [4, 128], strides = [1, 1]} : vector<4x256xf32> to vector<4x128xf32>
    %21 = vector.shape_cast %5 : vector<4x1xi1> to vector<4x1xi1>
    %22 = vector.broadcast %21 : vector<4x1xi1> to vector<4x128xi1>
    %23 = arith.select %22, %19, %20 : vector<4x128xi1>, vector<4x128xf32>
    %c0_7 = arith.constant 0 : index
    %c0_8 = arith.constant 0 : index
    %c0_9 = arith.constant 0 : index
    %24 = vector.load %arg2[%c0_7, %c0_8, %c0_9] : memref<8x4x128xf32, #tpu.memory_space<vmem>>, vector<1x4x128xf32>
    %25 = vector.shape_cast %24 : vector<1x4x128xf32> to vector<4x128xf32>
    %26 = arith.addf %25, %23 : vector<4x128xf32>
    %27 = vector.extract_strided_slice %26 {offsets = [0, 0], sizes = [4, 32], strides = [1, 1]} : vector<4x128xf32> to vector<4x32xf32>
    %28 = arith.negf %27 : vector<4x32xf32>
    %29 = math.exp %28 : vector<4x32xf32>
    %cst_10 = arith.constant 1.000000e+00 : f32
    %30 = vector.broadcast %cst_10 : f32 to vector<4x32xf32>
    %31 = arith.addf %30, %29 : vector<4x32xf32>
    %32 = arith.divf %30, %31 : vector<4x32xf32>
    %33 = vector.extract_strided_slice %26 {offsets = [0, 32], sizes = [4, 32], strides = [1, 1]} : vector<4x128xf32> to vector<4x32xf32>
    %34 = arith.negf %33 : vector<4x32xf32>
    %35 = math.exp %34 : vector<4x32xf32>
    %cst_11 = arith.constant 1.000000e+00 : f32
    %36 = vector.broadcast %cst_11 : f32 to vector<4x32xf32>
    %37 = arith.addf %36, %35 : vector<4x32xf32>
    %38 = arith.divf %36, %37 : vector<4x32xf32>
    %39 = vector.extract_strided_slice %26 {offsets = [0, 64], sizes = [4, 32], strides = [1, 1]} : vector<4x128xf32> to vector<4x32xf32>
    %40 = math.tanh %39 : vector<4x32xf32>
    %41 = vector.extract_strided_slice %26 {offsets = [0, 96], sizes = [4, 32], strides = [1, 1]} : vector<4x128xf32> to vector<4x32xf32>
    %42 = arith.negf %41 : vector<4x32xf32>
    %43 = math.exp %42 : vector<4x32xf32>
    %cst_12 = arith.constant 1.000000e+00 : f32
    %44 = vector.broadcast %cst_12 : f32 to vector<4x32xf32>
    %45 = arith.addf %44, %43 : vector<4x32xf32>
    %46 = arith.divf %44, %45 : vector<4x32xf32>
    %c0_13 = arith.constant 0 : index
    %c0_14 = arith.constant 0 : index
    %47 = vector.load %arg6[%c0_13, %c0_14] : memref<4x32xf32, #tpu.memory_space<vmem>>, vector<4x32xf32>
    %48 = arith.mulf %38, %47 : vector<4x32xf32>
    %49 = arith.mulf %32, %40 : vector<4x32xf32>
    %50 = arith.addf %48, %49 : vector<4x32xf32>
    %51 = math.tanh %50 : vector<4x32xf32>
    %52 = arith.mulf %46, %51 : vector<4x32xf32>
    %53 = vector.broadcast %15 : vector<4x1xf32> to vector<4x32xf32>
    %54 = arith.mulf %53, %52 : vector<4x32xf32>
    %cst_15 = arith.constant 1.000000e+00 : f32
    %55 = vector.broadcast %cst_15 : f32 to vector<4x1xf32>
    %56 = arith.subf %55, %15 : vector<4x1xf32>
    %c0_16 = arith.constant 0 : index
    %c0_17 = arith.constant 0 : index
    %57 = vector.load %arg5[%c0_16, %c0_17] : memref<4x32xf32, #tpu.memory_space<vmem>>, vector<4x32xf32>
    %58 = vector.broadcast %56 : vector<4x1xf32> to vector<4x32xf32>
    %59 = arith.mulf %58, %57 : vector<4x32xf32>
    %60 = arith.addf %54, %59 : vector<4x32xf32>
    %c0_18 = arith.constant 0 : index
    %c0_19 = arith.constant 0 : index
    %61 = vector.load %arg5[%c0_18, %c0_19] : memref<4x32xf32, #tpu.memory_space<vmem>>, vector<4x32xf32>
    tpu.vector_store %arg5[%c0_18, %c0_19], %60 {strides = array<i32>} : memref<4x32xf32, #tpu.memory_space<vmem>>, vector<4x32xf32>,
    %62 = vector.broadcast %15 : vector<4x1xf32> to vector<4x32xf32>
    %63 = arith.mulf %62, %50 : vector<4x32xf32>
    %cst_20 = arith.constant 1.000000e+00 : f32
    %64 = vector.broadcast %cst_20 : f32 to vector<4x1xf32>
    %65 = arith.subf %64, %15 : vector<4x1xf32>
    %c0_21 = arith.constant 0 : index
    %c0_22 = arith.constant 0 : index
    %66 = vector.load %arg6[%c0_21, %c0_22] : memref<4x32xf32, #tpu.memory_space<vmem>>, vector<4x32xf32>
    %67 = vector.broadcast %65 : vector<4x1xf32> to vector<4x32xf32>
    %68 = arith.mulf %67, %66 : vector<4x32xf32>
    %69 = arith.addf %63, %68 : vector<4x32xf32>
    %c0_23 = arith.constant 0 : index
    %c0_24 = arith.constant 0 : index
    %70 = vector.load %arg6[%c0_23, %c0_24] : memref<4x32xf32, #tpu.memory_space<vmem>>, vector<4x32xf32>
    tpu.vector_store %arg6[%c0_23, %c0_24], %69 {strides = array<i32>} : memref<4x32xf32, #tpu.memory_space<vmem>>, vector<4x32xf32>,
    %71 = vector.broadcast %15 : vector<4x1xf32> to vector<4x32xf32>
    %72 = arith.mulf %71, %52 : vector<4x32xf32>
    %c0_25 = arith.constant 0 : index
    %c0_26 = arith.constant 0 : index
    %c0_27 = arith.constant 0 : index
    %73 = vector.load %arg4[%c0_25, %c0_26, %c0_27] : memref<8x4x32xf32, #tpu.memory_space<vmem>>, vector<1x4x32xf32>
    %74 = vector.shape_cast %73 : vector<1x4x32xf32> to vector<4x32xf32>
    %75 = vector.shape_cast %72 : vector<4x32xf32> to vector<1x4x32xf32>
    tpu.vector_store %arg4[%c0_25, %c0_26, %c0_27], %75 {strides = array<i32>} : memref<8x4x32xf32, #tpu.memory_space<vmem>>, vector<1x4x32xf32>,
    %c1_i32 = arith.constant 1 : i32
    %76 = arith.addi %7, %c1_i32 : i32
    %c15_i32_28 = arith.constant 15 : i32
    %77 = arith.subi %c15_i32_28, %76 : i32
    %78 = vector.broadcast %76 : i32 to vector<4x1xi32>
    %79 = vector.broadcast %77 : i32 to vector<4x1xi32>
    %80 = arith.select %5, %78, %79 : vector<4x1xi1>, vector<4x1xi32>
    %81 = arith.cmpi slt, %80, %6 : vector<4x1xi32>
    %82 = arith.extui %81 : vector<4x1xi1> to vector<4x1xi32>
    %83 = arith.sitofp %82 : vector<4x1xi32> to vector<4x1xf32>
    %c0_29 = arith.constant 0 : index
    %c0_30 = arith.constant 0 : index
    %84 = vector.load %arg5[%c0_29, %c0_30] : memref<4x32xf32, #tpu.memory_space<vmem>>, vector<4x32xf32>
    %c0_31 = arith.constant 0 : index
    %c0_32 = arith.constant 0 : index
    %85 = vector.load %arg3[%c0_31, %c0_32] : memref<32x256xf32, #tpu.memory_space<vmem>>, vector<32x256xf32>
    %cst_33 = arith.constant dense<0.000000e+00> : vector<4x256xf32>
    %86 = tpu.matmul %84, %85, %cst_33 {dimension_numbers = #tpu.dot_dimension_numbers<[1], [0], [0], [1], [0, 0, 1, 1], [], []>} : vector<4x32xf32>, vector<32x256xf32>, vector<4x256xf32> -> vector<4x256xf32>
    %87 = vector.extract_strided_slice %86 {offsets = [0, 0], sizes = [4, 128], strides = [1, 1]} : vector<4x256xf32> to vector<4x128xf32>
    %88 = vector.extract_strided_slice %86 {offsets = [0, 128], sizes = [4, 128], strides = [1, 1]} : vector<4x256xf32> to vector<4x128xf32>
    %89 = vector.shape_cast %5 : vector<4x1xi1> to vector<4x1xi1>
    %90 = vector.broadcast %89 : vector<4x1xi1> to vector<4x128xi1>
    %91 = arith.select %90, %87, %88 : vector<4x128xi1>, vector<4x128xf32>
    %c1 = arith.constant 1 : index
    %c0_34 = arith.constant 0 : index
    %c0_35 = arith.constant 0 : index
    %92 = vector.load %arg2[%c1, %c0_34, %c0_35] : memref<8x4x128xf32, #tpu.memory_space<vmem>>, vector<1x4x128xf32>
    %93 = vector.shape_cast %92 : vector<1x4x128xf32> to vector<4x128xf32>
    %94 = arith.addf %93, %91 : vector<4x128xf32>
    %95 = vector.extract_strided_slice %94 {offsets = [0, 0], sizes = [4, 32], strides = [1, 1]} : vector<4x128xf32> to vector<4x32xf32>
    %96 = arith.negf %95 : vector<4x32xf32>
    %97 = math.exp %96 : vector<4x32xf32>
    %cst_36 = arith.constant 1.000000e+00 : f32
    %98 = vector.broadcast %cst_36 : f32 to vector<4x32xf32>
    %99 = arith.addf %98, %97 : vector<4x32xf32>
    %100 = arith.divf %98, %99 : vector<4x32xf32>
    %101 = vector.extract_strided_slice %94 {offsets = [0, 32], sizes = [4, 32], strides = [1, 1]} : vector<4x128xf32> to vector<4x32xf32>
    %102 = arith.negf %101 : vector<4x32xf32>
    %103 = math.exp %102 : vector<4x32xf32>
    %cst_37 = arith.constant 1.000000e+00 : f32
    %104 = vector.broadcast %cst_37 : f32 to vector<4x32xf32>
    %105 = arith.addf %104, %103 : vector<4x32xf32>
    %106 = arith.divf %104, %105 : vector<4x32xf32>
    %107 = vector.extract_strided_slice %94 {offsets = [0, 64], sizes = [4, 32], strides = [1, 1]} : vector<4x128xf32> to vector<4x32xf32>
    %108 = math.tanh %107 : vector<4x32xf32>
    %109 = vector.extract_strided_slice %94 {offsets = [0, 96], sizes = [4, 32], strides = [1, 1]} : vector<4x128xf32> to vector<4x32xf32>
    %110 = arith.negf %109 : vector<4x32xf32>
    %111 = math.exp %110 : vector<4x32xf32>
    %cst_38 = arith.constant 1.000000e+00 : f32
    %112 = vector.broadcast %cst_38 : f32 to vector<4x32xf32>
    %113 = arith.addf %112, %111 : vector<4x32xf32>
    %114 = arith.divf %112, %113 : vector<4x32xf32>
    %c0_39 = arith.constant 0 : index
    %c0_40 = arith.constant 0 : index
    %115 = vector.load %arg6[%c0_39, %c0_40] : memref<4x32xf32, #tpu.memory_space<vmem>>, vector<4x32xf32>
    %116 = arith.mulf %106, %115 : vector<4x32xf32>
    %117 = arith.mulf %100, %108 : vector<4x32xf32>
    %118 = arith.addf %116, %117 : vector<4x32xf32>
    %119 = math.tanh %118 : vector<4x32xf32>
    %120 = arith.mulf %114, %119 : vector<4x32xf32>
    %121 = vector.broadcast %83 : vector<4x1xf32> to vector<4x32xf32>
    %122 = arith.mulf %121, %120 : vector<4x32xf32>
    %cst_41 = arith.constant 1.000000e+00 : f32
    %123 = vector.broadcast %cst_41 : f32 to vector<4x1xf32>
    %124 = arith.subf %123, %83 : vector<4x1xf32>
    %c0_42 = arith.constant 0 : index
    %c0_43 = arith.constant 0 : index
    %125 = vector.load %arg5[%c0_42, %c0_43] : memref<4x32xf32, #tpu.memory_space<vmem>>, vector<4x32xf32>
    %126 = vector.broadcast %124 : vector<4x1xf32> to vector<4x32xf32>
    %127 = arith.mulf %126, %125 : vector<4x32xf32>
    %128 = arith.addf %122, %127 : vector<4x32xf32>
    %c0_44 = arith.constant 0 : index
    %c0_45 = arith.constant 0 : index
    %129 = vector.load %arg5[%c0_44, %c0_45] : memref<4x32xf32, #tpu.memory_space<vmem>>, vector<4x32xf32>
    tpu.vector_store %arg5[%c0_44, %c0_45], %128 {strides = array<i32>} : memref<4x32xf32, #tpu.memory_space<vmem>>, vector<4x32xf32>,
    %130 = vector.broadcast %83 : vector<4x1xf32> to vector<4x32xf32>
    %131 = arith.mulf %130, %118 : vector<4x32xf32>
    %cst_46 = arith.constant 1.000000e+00 : f32
    %132 = vector.broadcast %cst_46 : f32 to vector<4x1xf32>
    %133 = arith.subf %132, %83 : vector<4x1xf32>
    %c0_47 = arith.constant 0 : index
    %c0_48 = arith.constant 0 : index
    %134 = vector.load %arg6[%c0_47, %c0_48] : memref<4x32xf32, #tpu.memory_space<vmem>>, vector<4x32xf32>
    %135 = vector.broadcast %133 : vector<4x1xf32> to vector<4x32xf32>
    %136 = arith.mulf %135, %134 : vector<4x32xf32>
    %137 = arith.addf %131, %136 : vector<4x32xf32>
    %c0_49 = arith.constant 0 : index
    %c0_50 = arith.constant 0 : index
    %138 = vector.load %arg6[%c0_49, %c0_50] : memref<4x32xf32, #tpu.memory_space<vmem>>, vector<4x32xf32>
    tpu.vector_store %arg6[%c0_49, %c0_50], %137 {strides = array<i32>} : memref<4x32xf32, #tpu.memory_space<vmem>>, vector<4x32xf32>,
    %139 = vector.broadcast %83 : vector<4x1xf32> to vector<4x32xf32>
    %140 = arith.mulf %139, %120 : vector<4x32xf32>
    %c1_51 = arith.constant 1 : index
    %c0_52 = arith.constant 0 : index
    %c0_53 = arith.constant 0 : index
    %141 = vector.load %arg4[%c1_51, %c0_52, %c0_53] : memref<8x4x32xf32, #tpu.memory_space<vmem>>, vector<1x4x32xf32>
    %142 = vector.shape_cast %141 : vector<1x4x32xf32> to vector<4x32xf32>
    %143 = vector.shape_cast %140 : vector<4x32xf32> to vector<1x4x32xf32>
    tpu.vector_store %arg4[%c1_51, %c0_52, %c0_53], %143 {strides = array<i32>} : memref<8x4x32xf32, #tpu.memory_space<vmem>>, vector<1x4x32xf32>,
    %c2_i32_54 = arith.constant 2 : i32
    %144 = arith.addi %7, %c2_i32_54 : i32
    %c15_i32_55 = arith.constant 15 : i32
    %145 = arith.subi %c15_i32_55, %144 : i32
    %146 = vector.broadcast %144 : i32 to vector<4x1xi32>
    %147 = vector.broadcast %145 : i32 to vector<4x1xi32>
    %148 = arith.select %5, %146, %147 : vector<4x1xi1>, vector<4x1xi32>
    %149 = arith.cmpi slt, %148, %6 : vector<4x1xi32>
    %150 = arith.extui %149 : vector<4x1xi1> to vector<4x1xi32>
    %151 = arith.sitofp %150 : vector<4x1xi32> to vector<4x1xf32>
    %c0_56 = arith.constant 0 : index
    %c0_57 = arith.constant 0 : index
    %152 = vector.load %arg5[%c0_56, %c0_57] : memref<4x32xf32, #tpu.memory_space<vmem>>, vector<4x32xf32>
    %c0_58 = arith.constant 0 : index
    %c0_59 = arith.constant 0 : index
    %153 = vector.load %arg3[%c0_58, %c0_59] : memref<32x256xf32, #tpu.memory_space<vmem>>, vector<32x256xf32>
    %cst_60 = arith.constant dense<0.000000e+00> : vector<4x256xf32>
    %154 = tpu.matmul %152, %153, %cst_60 {dimension_numbers = #tpu.dot_dimension_numbers<[1], [0], [0], [1], [0, 0, 1, 1], [], []>} : vector<4x32xf32>, vector<32x256xf32>, vector<4x256xf32> -> vector<4x256xf32>
    %155 = vector.extract_strided_slice %154 {offsets = [0, 0], sizes = [4, 128], strides = [1, 1]} : vector<4x256xf32> to vector<4x128xf32>
    %156 = vector.extract_strided_slice %154 {offsets = [0, 128], sizes = [4, 128], strides = [1, 1]} : vector<4x256xf32> to vector<4x128xf32>
    %157 = vector.shape_cast %5 : vector<4x1xi1> to vector<4x1xi1>
    %158 = vector.broadcast %157 : vector<4x1xi1> to vector<4x128xi1>
    %159 = arith.select %158, %155, %156 : vector<4x128xi1>, vector<4x128xf32>
    %c2 = arith.constant 2 : index
    %c0_61 = arith.constant 0 : index
    %c0_62 = arith.constant 0 : index
    %160 = vector.load %arg2[%c2, %c0_61, %c0_62] : memref<8x4x128xf32, #tpu.memory_space<vmem>>, vector<1x4x128xf32>
    %161 = vector.shape_cast %160 : vector<1x4x128xf32> to vector<4x128xf32>
    %162 = arith.addf %161, %159 : vector<4x128xf32>
    %163 = vector.extract_strided_slice %162 {offsets = [0, 0], sizes = [4, 32], strides = [1, 1]} : vector<4x128xf32> to vector<4x32xf32>
    %164 = arith.negf %163 : vector<4x32xf32>
    %165 = math.exp %164 : vector<4x32xf32>
    %cst_63 = arith.constant 1.000000e+00 : f32
    %166 = vector.broadcast %cst_63 : f32 to vector<4x32xf32>
    %167 = arith.addf %166, %165 : vector<4x32xf32>
    %168 = arith.divf %166, %167 : vector<4x32xf32>
    %169 = vector.extract_strided_slice %162 {offsets = [0, 32], sizes = [4, 32], strides = [1, 1]} : vector<4x128xf32> to vector<4x32xf32>
    %170 = arith.negf %169 : vector<4x32xf32>
    %171 = math.exp %170 : vector<4x32xf32>
    %cst_64 = arith.constant 1.000000e+00 : f32
    %172 = vector.broadcast %cst_64 : f32 to vector<4x32xf32>
    %173 = arith.addf %172, %171 : vector<4x32xf32>
    %174 = arith.divf %172, %173 : vector<4x32xf32>
    %175 = vector.extract_strided_slice %162 {offsets = [0, 64], sizes = [4, 32], strides = [1, 1]} : vector<4x128xf32> to vector<4x32xf32>
    %176 = math.tanh %175 : vector<4x32xf32>
    %177 = vector.extract_strided_slice %162 {offsets = [0, 96], sizes = [4, 32], strides = [1, 1]} : vector<4x128xf32> to vector<4x32xf32>
    %178 = arith.negf %177 : vector<4x32xf32>
    %179 = math.exp %178 : vector<4x32xf32>
    %cst_65 = arith.constant 1.000000e+00 : f32
    %180 = vector.broadcast %cst_65 : f32 to vector<4x32xf32>
    %181 = arith.addf %180, %179 : vector<4x32xf32>
    %182 = arith.divf %180, %181 : vector<4x32xf32>
    %c0_66 = arith.constant 0 : index
    %c0_67 = arith.constant 0 : index
    %183 = vector.load %arg6[%c0_66, %c0_67] : memref<4x32xf32, #tpu.memory_space<vmem>>, vector<4x32xf32>
    %184 = arith.mulf %174, %183 : vector<4x32xf32>
    %185 = arith.mulf %168, %176 : vector<4x32xf32>
    %186 = arith.addf %184, %185 : vector<4x32xf32>
    %187 = math.tanh %186 : vector<4x32xf32>
    %188 = arith.mulf %182, %187 : vector<4x32xf32>
    %189 = vector.broadcast %151 : vector<4x1xf32> to vector<4x32xf32>
    %190 = arith.mulf %189, %188 : vector<4x32xf32>
    %cst_68 = arith.constant 1.000000e+00 : f32
    %191 = vector.broadcast %cst_68 : f32 to vector<4x1xf32>
    %192 = arith.subf %191, %151 : vector<4x1xf32>
    %c0_69 = arith.constant 0 : index
    %c0_70 = arith.constant 0 : index
    %193 = vector.load %arg5[%c0_69, %c0_70] : memref<4x32xf32, #tpu.memory_space<vmem>>, vector<4x32xf32>
    %194 = vector.broadcast %192 : vector<4x1xf32> to vector<4x32xf32>
    %195 = arith.mulf %194, %193 : vector<4x32xf32>
    %196 = arith.addf %190, %195 : vector<4x32xf32>
    %c0_71 = arith.constant 0 : index
    %c0_72 = arith.constant 0 : index
    %197 = vector.load %arg5[%c0_71, %c0_72] : memref<4x32xf32, #tpu.memory_space<vmem>>, vector<4x32xf32>
    tpu.vector_store %arg5[%c0_71, %c0_72], %196 {strides = array<i32>} : memref<4x32xf32, #tpu.memory_space<vmem>>, vector<4x32xf32>,
    %198 = vector.broadcast %151 : vector<4x1xf32> to vector<4x32xf32>
    %199 = arith.mulf %198, %186 : vector<4x32xf32>
    %cst_73 = arith.constant 1.000000e+00 : f32
    %200 = vector.broadcast %cst_73 : f32 to vector<4x1xf32>
    %201 = arith.subf %200, %151 : vector<4x1xf32>
    %c0_74 = arith.constant 0 : index
    %c0_75 = arith.constant 0 : index
    %202 = vector.load %arg6[%c0_74, %c0_75] : memref<4x32xf32, #tpu.memory_space<vmem>>, vector<4x32xf32>
    %203 = vector.broadcast %201 : vector<4x1xf32> to vector<4x32xf32>
    %204 = arith.mulf %203, %202 : vector<4x32xf32>
    %205 = arith.addf %199, %204 : vector<4x32xf32>
    %c0_76 = arith.constant 0 : index
    %c0_77 = arith.constant 0 : index
    %206 = vector.load %arg6[%c0_76, %c0_77] : memref<4x32xf32, #tpu.memory_space<vmem>>, vector<4x32xf32>
    tpu.vector_store %arg6[%c0_76, %c0_77], %205 {strides = array<i32>} : memref<4x32xf32, #tpu.memory_space<vmem>>, vector<4x32xf32>,
    %207 = vector.broadcast %151 : vector<4x1xf32> to vector<4x32xf32>
    %208 = arith.mulf %207, %188 : vector<4x32xf32>
    %c2_78 = arith.constant 2 : index
    %c0_79 = arith.constant 0 : index
    %c0_80 = arith.constant 0 : index
    %209 = vector.load %arg4[%c2_78, %c0_79, %c0_80] : memref<8x4x32xf32, #tpu.memory_space<vmem>>, vector<1x4x32xf32>
    %210 = vector.shape_cast %209 : vector<1x4x32xf32> to vector<4x32xf32>
    %211 = vector.shape_cast %208 : vector<4x32xf32> to vector<1x4x32xf32>
    tpu.vector_store %arg4[%c2_78, %c0_79, %c0_80], %211 {strides = array<i32>} : memref<8x4x32xf32, #tpu.memory_space<vmem>>, vector<1x4x32xf32>,
    %c3_i32 = arith.constant 3 : i32
    %212 = arith.addi %7, %c3_i32 : i32
    %c15_i32_81 = arith.constant 15 : i32
    %213 = arith.subi %c15_i32_81, %212 : i32
    %214 = vector.broadcast %212 : i32 to vector<4x1xi32>
    %215 = vector.broadcast %213 : i32 to vector<4x1xi32>
    %216 = arith.select %5, %214, %215 : vector<4x1xi1>, vector<4x1xi32>
    %217 = arith.cmpi slt, %216, %6 : vector<4x1xi32>
    %218 = arith.extui %217 : vector<4x1xi1> to vector<4x1xi32>
    %219 = arith.sitofp %218 : vector<4x1xi32> to vector<4x1xf32>
    %c0_82 = arith.constant 0 : index
    %c0_83 = arith.constant 0 : index
    %220 = vector.load %arg5[%c0_82, %c0_83] : memref<4x32xf32, #tpu.memory_space<vmem>>, vector<4x32xf32>
    %c0_84 = arith.constant 0 : index
    %c0_85 = arith.constant 0 : index
    %221 = vector.load %arg3[%c0_84, %c0_85] : memref<32x256xf32, #tpu.memory_space<vmem>>, vector<32x256xf32>
    %cst_86 = arith.constant dense<0.000000e+00> : vector<4x256xf32>
    %222 = tpu.matmul %220, %221, %cst_86 {dimension_numbers = #tpu.dot_dimension_numbers<[1], [0], [0], [1], [0, 0, 1, 1], [], []>} : vector<4x32xf32>, vector<32x256xf32>, vector<4x256xf32> -> vector<4x256xf32>
    %223 = vector.extract_strided_slice %222 {offsets = [0, 0], sizes = [4, 128], strides = [1, 1]} : vector<4x256xf32> to vector<4x128xf32>
    %224 = vector.extract_strided_slice %222 {offsets = [0, 128], sizes = [4, 128], strides = [1, 1]} : vector<4x256xf32> to vector<4x128xf32>
    %225 = vector.shape_cast %5 : vector<4x1xi1> to vector<4x1xi1>
    %226 = vector.broadcast %225 : vector<4x1xi1> to vector<4x128xi1>
    %227 = arith.select %226, %223, %224 : vector<4x128xi1>, vector<4x128xf32>
    %c3 = arith.constant 3 : index
    %c0_87 = arith.constant 0 : index
    %c0_88 = arith.constant 0 : index
    %228 = vector.load %arg2[%c3, %c0_87, %c0_88] : memref<8x4x128xf32, #tpu.memory_space<vmem>>, vector<1x4x128xf32>
    %229 = vector.shape_cast %228 : vector<1x4x128xf32> to vector<4x128xf32>
    %230 = arith.addf %229, %227 : vector<4x128xf32>
    %231 = vector.extract_strided_slice %230 {offsets = [0, 0], sizes = [4, 32], strides = [1, 1]} : vector<4x128xf32> to vector<4x32xf32>
    %232 = arith.negf %231 : vector<4x32xf32>
    %233 = math.exp %232 : vector<4x32xf32>
    %cst_89 = arith.constant 1.000000e+00 : f32
    %234 = vector.broadcast %cst_89 : f32 to vector<4x32xf32>
    %235 = arith.addf %234, %233 : vector<4x32xf32>
    %236 = arith.divf %234, %235 : vector<4x32xf32>
    %237 = vector.extract_strided_slice %230 {offsets = [0, 32], sizes = [4, 32], strides = [1, 1]} : vector<4x128xf32> to vector<4x32xf32>
    %238 = arith.negf %237 : vector<4x32xf32>
    %239 = math.exp %238 : vector<4x32xf32>
    %cst_90 = arith.constant 1.000000e+00 : f32
    %240 = vector.broadcast %cst_90 : f32 to vector<4x32xf32>
    %241 = arith.addf %240, %239 : vector<4x32xf32>
    %242 = arith.divf %240, %241 : vector<4x32xf32>
    %243 = vector.extract_strided_slice %230 {offsets = [0, 64], sizes = [4, 32], strides = [1, 1]} : vector<4x128xf32> to vector<4x32xf32>
    %244 = math.tanh %243 : vector<4x32xf32>
    %245 = vector.extract_strided_slice %230 {offsets = [0, 96], sizes = [4, 32], strides = [1, 1]} : vector<4x128xf32> to vector<4x32xf32>
    %246 = arith.negf %245 : vector<4x32xf32>
    %247 = math.exp %246 : vector<4x32xf32>
    %cst_91 = arith.constant 1.000000e+00 : f32
    %248 = vector.broadcast %cst_91 : f32 to vector<4x32xf32>
    %249 = arith.addf %248, %247 : vector<4x32xf32>
    %250 = arith.divf %248, %249 : vector<4x32xf32>
    %c0_92 = arith.constant 0 : index
    %c0_93 = arith.constant 0 : index
    %251 = vector.load %arg6[%c0_92, %c0_93] : memref<4x32xf32, #tpu.memory_space<vmem>>, vector<4x32xf32>
    %252 = arith.mulf %242, %251 : vector<4x32xf32>
    %253 = arith.mulf %236, %244 : vector<4x32xf32>
    %254 = arith.addf %252, %253 : vector<4x32xf32>
    %255 = math.tanh %254 : vector<4x32xf32>
    %256 = arith.mulf %250, %255 : vector<4x32xf32>
    %257 = vector.broadcast %219 : vector<4x1xf32> to vector<4x32xf32>
    %258 = arith.mulf %257, %256 : vector<4x32xf32>
    %cst_94 = arith.constant 1.000000e+00 : f32
    %259 = vector.broadcast %cst_94 : f32 to vector<4x1xf32>
    %260 = arith.subf %259, %219 : vector<4x1xf32>
    %c0_95 = arith.constant 0 : index
    %c0_96 = arith.constant 0 : index
    %261 = vector.load %arg5[%c0_95, %c0_96] : memref<4x32xf32, #tpu.memory_space<vmem>>, vector<4x32xf32>
    %262 = vector.broadcast %260 : vector<4x1xf32> to vector<4x32xf32>
    %263 = arith.mulf %262, %261 : vector<4x32xf32>
    %264 = arith.addf %258, %263 : vector<4x32xf32>
    %c0_97 = arith.constant 0 : index
    %c0_98 = arith.constant 0 : index
    %265 = vector.load %arg5[%c0_97, %c0_98] : memref<4x32xf32, #tpu.memory_space<vmem>>, vector<4x32xf32>
    tpu.vector_store %arg5[%c0_97, %c0_98], %264 {strides = array<i32>} : memref<4x32xf32, #tpu.memory_space<vmem>>, vector<4x32xf32>,
    %266 = vector.broadcast %219 : vector<4x1xf32> to vector<4x32xf32>
    %267 = arith.mulf %266, %254 : vector<4x32xf32>
    %cst_99 = arith.constant 1.000000e+00 : f32
    %268 = vector.broadcast %cst_99 : f32 to vector<4x1xf32>
    %269 = arith.subf %268, %219 : vector<4x1xf32>
    %c0_100 = arith.constant 0 : index
    %c0_101 = arith.constant 0 : index
    %270 = vector.load %arg6[%c0_100, %c0_101] : memref<4x32xf32, #tpu.memory_space<vmem>>, vector<4x32xf32>
    %271 = vector.broadcast %269 : vector<4x1xf32> to vector<4x32xf32>
    %272 = arith.mulf %271, %270 : vector<4x32xf32>
    %273 = arith.addf %267, %272 : vector<4x32xf32>
    %c0_102 = arith.constant 0 : index
    %c0_103 = arith.constant 0 : index
    %274 = vector.load %arg6[%c0_102, %c0_103] : memref<4x32xf32, #tpu.memory_space<vmem>>, vector<4x32xf32>
    tpu.vector_store %arg6[%c0_102, %c0_103], %273 {strides = array<i32>} : memref<4x32xf32, #tpu.memory_space<vmem>>, vector<4x32xf32>,
    %275 = vector.broadcast %219 : vector<4x1xf32> to vector<4x32xf32>
    %276 = arith.mulf %275, %256 : vector<4x32xf32>
    %c3_104 = arith.constant 3 : index
    %c0_105 = arith.constant 0 : index
    %c0_106 = arith.constant 0 : index
    %277 = vector.load %arg4[%c3_104, %c0_105, %c0_106] : memref<8x4x32xf32, #tpu.memory_space<vmem>>, vector<1x4x32xf32>
    %278 = vector.shape_cast %277 : vector<1x4x32xf32> to vector<4x32xf32>
    %279 = vector.shape_cast %276 : vector<4x32xf32> to vector<1x4x32xf32>
    tpu.vector_store %arg4[%c3_104, %c0_105, %c0_106], %279 {strides = array<i32>} : memref<8x4x32xf32, #tpu.memory_space<vmem>>, vector<1x4x32xf32>,
    %c4_i32 = arith.constant 4 : i32
    %280 = arith.addi %7, %c4_i32 : i32
    %c15_i32_107 = arith.constant 15 : i32
    %281 = arith.subi %c15_i32_107, %280 : i32
    %282 = vector.broadcast %280 : i32 to vector<4x1xi32>
    %283 = vector.broadcast %281 : i32 to vector<4x1xi32>
    %284 = arith.select %5, %282, %283 : vector<4x1xi1>, vector<4x1xi32>
    %285 = arith.cmpi slt, %284, %6 : vector<4x1xi32>
    %286 = arith.extui %285 : vector<4x1xi1> to vector<4x1xi32>
    %287 = arith.sitofp %286 : vector<4x1xi32> to vector<4x1xf32>
    %c0_108 = arith.constant 0 : index
    %c0_109 = arith.constant 0 : index
    %288 = vector.load %arg5[%c0_108, %c0_109] : memref<4x32xf32, #tpu.memory_space<vmem>>, vector<4x32xf32>
    %c0_110 = arith.constant 0 : index
    %c0_111 = arith.constant 0 : index
    %289 = vector.load %arg3[%c0_110, %c0_111] : memref<32x256xf32, #tpu.memory_space<vmem>>, vector<32x256xf32>
    %cst_112 = arith.constant dense<0.000000e+00> : vector<4x256xf32>
    %290 = tpu.matmul %288, %289, %cst_112 {dimension_numbers = #tpu.dot_dimension_numbers<[1], [0], [0], [1], [0, 0, 1, 1], [], []>} : vector<4x32xf32>, vector<32x256xf32>, vector<4x256xf32> -> vector<4x256xf32>
    %291 = vector.extract_strided_slice %290 {offsets = [0, 0], sizes = [4, 128], strides = [1, 1]} : vector<4x256xf32> to vector<4x128xf32>
    %292 = vector.extract_strided_slice %290 {offsets = [0, 128], sizes = [4, 128], strides = [1, 1]} : vector<4x256xf32> to vector<4x128xf32>
    %293 = vector.shape_cast %5 : vector<4x1xi1> to vector<4x1xi1>
    %294 = vector.broadcast %293 : vector<4x1xi1> to vector<4x128xi1>
    %295 = arith.select %294, %291, %292 : vector<4x128xi1>, vector<4x128xf32>
    %c4 = arith.constant 4 : index
    %c0_113 = arith.constant 0 : index
    %c0_114 = arith.constant 0 : index
    %296 = vector.load %arg2[%c4, %c0_113, %c0_114] : memref<8x4x128xf32, #tpu.memory_space<vmem>>, vector<1x4x128xf32>
    %297 = vector.shape_cast %296 : vector<1x4x128xf32> to vector<4x128xf32>
    %298 = arith.addf %297, %295 : vector<4x128xf32>
    %299 = vector.extract_strided_slice %298 {offsets = [0, 0], sizes = [4, 32], strides = [1, 1]} : vector<4x128xf32> to vector<4x32xf32>
    %300 = arith.negf %299 : vector<4x32xf32>
    %301 = math.exp %300 : vector<4x32xf32>
    %cst_115 = arith.constant 1.000000e+00 : f32
    %302 = vector.broadcast %cst_115 : f32 to vector<4x32xf32>
    %303 = arith.addf %302, %301 : vector<4x32xf32>
    %304 = arith.divf %302, %303 : vector<4x32xf32>
    %305 = vector.extract_strided_slice %298 {offsets = [0, 32], sizes = [4, 32], strides = [1, 1]} : vector<4x128xf32> to vector<4x32xf32>
    %306 = arith.negf %305 : vector<4x32xf32>
    %307 = math.exp %306 : vector<4x32xf32>
    %cst_116 = arith.constant 1.000000e+00 : f32
    %308 = vector.broadcast %cst_116 : f32 to vector<4x32xf32>
    %309 = arith.addf %308, %307 : vector<4x32xf32>
    %310 = arith.divf %308, %309 : vector<4x32xf32>
    %311 = vector.extract_strided_slice %298 {offsets = [0, 64], sizes = [4, 32], strides = [1, 1]} : vector<4x128xf32> to vector<4x32xf32>
    %312 = math.tanh %311 : vector<4x32xf32>
    %313 = vector.extract_strided_slice %298 {offsets = [0, 96], sizes = [4, 32], strides = [1, 1]} : vector<4x128xf32> to vector<4x32xf32>
    %314 = arith.negf %313 : vector<4x32xf32>
    %315 = math.exp %314 : vector<4x32xf32>
    %cst_117 = arith.constant 1.000000e+00 : f32
    %316 = vector.broadcast %cst_117 : f32 to vector<4x32xf32>
    %317 = arith.addf %316, %315 : vector<4x32xf32>
    %318 = arith.divf %316, %317 : vector<4x32xf32>
    %c0_118 = arith.constant 0 : index
    %c0_119 = arith.constant 0 : index
    %319 = vector.load %arg6[%c0_118, %c0_119] : memref<4x32xf32, #tpu.memory_space<vmem>>, vector<4x32xf32>
    %320 = arith.mulf %310, %319 : vector<4x32xf32>
    %321 = arith.mulf %304, %312 : vector<4x32xf32>
    %322 = arith.addf %320, %321 : vector<4x32xf32>
    %323 = math.tanh %322 : vector<4x32xf32>
    %324 = arith.mulf %318, %323 : vector<4x32xf32>
    %325 = vector.broadcast %287 : vector<4x1xf32> to vector<4x32xf32>
    %326 = arith.mulf %325, %324 : vector<4x32xf32>
    %cst_120 = arith.constant 1.000000e+00 : f32
    %327 = vector.broadcast %cst_120 : f32 to vector<4x1xf32>
    %328 = arith.subf %327, %287 : vector<4x1xf32>
    %c0_121 = arith.constant 0 : index
    %c0_122 = arith.constant 0 : index
    %329 = vector.load %arg5[%c0_121, %c0_122] : memref<4x32xf32, #tpu.memory_space<vmem>>, vector<4x32xf32>
    %330 = vector.broadcast %328 : vector<4x1xf32> to vector<4x32xf32>
    %331 = arith.mulf %330, %329 : vector<4x32xf32>
    %332 = arith.addf %326, %331 : vector<4x32xf32>
    %c0_123 = arith.constant 0 : index
    %c0_124 = arith.constant 0 : index
    %333 = vector.load %arg5[%c0_123, %c0_124] : memref<4x32xf32, #tpu.memory_space<vmem>>, vector<4x32xf32>
    tpu.vector_store %arg5[%c0_123, %c0_124], %332 {strides = array<i32>} : memref<4x32xf32, #tpu.memory_space<vmem>>, vector<4x32xf32>,
    %334 = vector.broadcast %287 : vector<4x1xf32> to vector<4x32xf32>
    %335 = arith.mulf %334, %322 : vector<4x32xf32>
    %cst_125 = arith.constant 1.000000e+00 : f32
    %336 = vector.broadcast %cst_125 : f32 to vector<4x1xf32>
    %337 = arith.subf %336, %287 : vector<4x1xf32>
    %c0_126 = arith.constant 0 : index
    %c0_127 = arith.constant 0 : index
    %338 = vector.load %arg6[%c0_126, %c0_127] : memref<4x32xf32, #tpu.memory_space<vmem>>, vector<4x32xf32>
    %339 = vector.broadcast %337 : vector<4x1xf32> to vector<4x32xf32>
    %340 = arith.mulf %339, %338 : vector<4x32xf32>
    %341 = arith.addf %335, %340 : vector<4x32xf32>
    %c0_128 = arith.constant 0 : index
    %c0_129 = arith.constant 0 : index
    %342 = vector.load %arg6[%c0_128, %c0_129] : memref<4x32xf32, #tpu.memory_space<vmem>>, vector<4x32xf32>
    tpu.vector_store %arg6[%c0_128, %c0_129], %341 {strides = array<i32>} : memref<4x32xf32, #tpu.memory_space<vmem>>, vector<4x32xf32>,
    %343 = vector.broadcast %287 : vector<4x1xf32> to vector<4x32xf32>
    %344 = arith.mulf %343, %324 : vector<4x32xf32>
    %c4_130 = arith.constant 4 : index
    %c0_131 = arith.constant 0 : index
    %c0_132 = arith.constant 0 : index
    %345 = vector.load %arg4[%c4_130, %c0_131, %c0_132] : memref<8x4x32xf32, #tpu.memory_space<vmem>>, vector<1x4x32xf32>
    %346 = vector.shape_cast %345 : vector<1x4x32xf32> to vector<4x32xf32>
    %347 = vector.shape_cast %344 : vector<4x32xf32> to vector<1x4x32xf32>
    tpu.vector_store %arg4[%c4_130, %c0_131, %c0_132], %347 {strides = array<i32>} : memref<8x4x32xf32, #tpu.memory_space<vmem>>, vector<1x4x32xf32>,
    %c5_i32 = arith.constant 5 : i32
    %348 = arith.addi %7, %c5_i32 : i32
    %c15_i32_133 = arith.constant 15 : i32
    %349 = arith.subi %c15_i32_133, %348 : i32
    %350 = vector.broadcast %348 : i32 to vector<4x1xi32>
    %351 = vector.broadcast %349 : i32 to vector<4x1xi32>
    %352 = arith.select %5, %350, %351 : vector<4x1xi1>, vector<4x1xi32>
    %353 = arith.cmpi slt, %352, %6 : vector<4x1xi32>
    %354 = arith.extui %353 : vector<4x1xi1> to vector<4x1xi32>
    %355 = arith.sitofp %354 : vector<4x1xi32> to vector<4x1xf32>
    %c0_134 = arith.constant 0 : index
    %c0_135 = arith.constant 0 : index
    %356 = vector.load %arg5[%c0_134, %c0_135] : memref<4x32xf32, #tpu.memory_space<vmem>>, vector<4x32xf32>
    %c0_136 = arith.constant 0 : index
    %c0_137 = arith.constant 0 : index
    %357 = vector.load %arg3[%c0_136, %c0_137] : memref<32x256xf32, #tpu.memory_space<vmem>>, vector<32x256xf32>
    %cst_138 = arith.constant dense<0.000000e+00> : vector<4x256xf32>
    %358 = tpu.matmul %356, %357, %cst_138 {dimension_numbers = #tpu.dot_dimension_numbers<[1], [0], [0], [1], [0, 0, 1, 1], [], []>} : vector<4x32xf32>, vector<32x256xf32>, vector<4x256xf32> -> vector<4x256xf32>
    %359 = vector.extract_strided_slice %358 {offsets = [0, 0], sizes = [4, 128], strides = [1, 1]} : vector<4x256xf32> to vector<4x128xf32>
    %360 = vector.extract_strided_slice %358 {offsets = [0, 128], sizes = [4, 128], strides = [1, 1]} : vector<4x256xf32> to vector<4x128xf32>
    %361 = vector.shape_cast %5 : vector<4x1xi1> to vector<4x1xi1>
    %362 = vector.broadcast %361 : vector<4x1xi1> to vector<4x128xi1>
    %363 = arith.select %362, %359, %360 : vector<4x128xi1>, vector<4x128xf32>
    %c5 = arith.constant 5 : index
    %c0_139 = arith.constant 0 : index
    %c0_140 = arith.constant 0 : index
    %364 = vector.load %arg2[%c5, %c0_139, %c0_140] : memref<8x4x128xf32, #tpu.memory_space<vmem>>, vector<1x4x128xf32>
    %365 = vector.shape_cast %364 : vector<1x4x128xf32> to vector<4x128xf32>
    %366 = arith.addf %365, %363 : vector<4x128xf32>
    %367 = vector.extract_strided_slice %366 {offsets = [0, 0], sizes = [4, 32], strides = [1, 1]} : vector<4x128xf32> to vector<4x32xf32>
    %368 = arith.negf %367 : vector<4x32xf32>
    %369 = math.exp %368 : vector<4x32xf32>
    %cst_141 = arith.constant 1.000000e+00 : f32
    %370 = vector.broadcast %cst_141 : f32 to vector<4x32xf32>
    %371 = arith.addf %370, %369 : vector<4x32xf32>
    %372 = arith.divf %370, %371 : vector<4x32xf32>
    %373 = vector.extract_strided_slice %366 {offsets = [0, 32], sizes = [4, 32], strides = [1, 1]} : vector<4x128xf32> to vector<4x32xf32>
    %374 = arith.negf %373 : vector<4x32xf32>
    %375 = math.exp %374 : vector<4x32xf32>
    %cst_142 = arith.constant 1.000000e+00 : f32
    %376 = vector.broadcast %cst_142 : f32 to vector<4x32xf32>
    %377 = arith.addf %376, %375 : vector<4x32xf32>
    %378 = arith.divf %376, %377 : vector<4x32xf32>
    %379 = vector.extract_strided_slice %366 {offsets = [0, 64], sizes = [4, 32], strides = [1, 1]} : vector<4x128xf32> to vector<4x32xf32>
    %380 = math.tanh %379 : vector<4x32xf32>
    %381 = vector.extract_strided_slice %366 {offsets = [0, 96], sizes = [4, 32], strides = [1, 1]} : vector<4x128xf32> to vector<4x32xf32>
    %382 = arith.negf %381 : vector<4x32xf32>
    %383 = math.exp %382 : vector<4x32xf32>
    %cst_143 = arith.constant 1.000000e+00 : f32
    %384 = vector.broadcast %cst_143 : f32 to vector<4x32xf32>
    %385 = arith.addf %384, %383 : vector<4x32xf32>
    %386 = arith.divf %384, %385 : vector<4x32xf32>
    %c0_144 = arith.constant 0 : index
    %c0_145 = arith.constant 0 : index
    %387 = vector.load %arg6[%c0_144, %c0_145] : memref<4x32xf32, #tpu.memory_space<vmem>>, vector<4x32xf32>
    %388 = arith.mulf %378, %387 : vector<4x32xf32>
    %389 = arith.mulf %372, %380 : vector<4x32xf32>
    %390 = arith.addf %388, %389 : vector<4x32xf32>
    %391 = math.tanh %390 : vector<4x32xf32>
    %392 = arith.mulf %386, %391 : vector<4x32xf32>
    %393 = vector.broadcast %355 : vector<4x1xf32> to vector<4x32xf32>
    %394 = arith.mulf %393, %392 : vector<4x32xf32>
    %cst_146 = arith.constant 1.000000e+00 : f32
    %395 = vector.broadcast %cst_146 : f32 to vector<4x1xf32>
    %396 = arith.subf %395, %355 : vector<4x1xf32>
    %c0_147 = arith.constant 0 : index
    %c0_148 = arith.constant 0 : index
    %397 = vector.load %arg5[%c0_147, %c0_148] : memref<4x32xf32, #tpu.memory_space<vmem>>, vector<4x32xf32>
    %398 = vector.broadcast %396 : vector<4x1xf32> to vector<4x32xf32>
    %399 = arith.mulf %398, %397 : vector<4x32xf32>
    %400 = arith.addf %394, %399 : vector<4x32xf32>
    %c0_149 = arith.constant 0 : index
    %c0_150 = arith.constant 0 : index
    %401 = vector.load %arg5[%c0_149, %c0_150] : memref<4x32xf32, #tpu.memory_space<vmem>>, vector<4x32xf32>
    tpu.vector_store %arg5[%c0_149, %c0_150], %400 {strides = array<i32>} : memref<4x32xf32, #tpu.memory_space<vmem>>, vector<4x32xf32>,
    %402 = vector.broadcast %355 : vector<4x1xf32> to vector<4x32xf32>
    %403 = arith.mulf %402, %390 : vector<4x32xf32>
    %cst_151 = arith.constant 1.000000e+00 : f32
    %404 = vector.broadcast %cst_151 : f32 to vector<4x1xf32>
    %405 = arith.subf %404, %355 : vector<4x1xf32>
    %c0_152 = arith.constant 0 : index
    %c0_153 = arith.constant 0 : index
    %406 = vector.load %arg6[%c0_152, %c0_153] : memref<4x32xf32, #tpu.memory_space<vmem>>, vector<4x32xf32>
    %407 = vector.broadcast %405 : vector<4x1xf32> to vector<4x32xf32>
    %408 = arith.mulf %407, %406 : vector<4x32xf32>
    %409 = arith.addf %403, %408 : vector<4x32xf32>
    %c0_154 = arith.constant 0 : index
    %c0_155 = arith.constant 0 : index
    %410 = vector.load %arg6[%c0_154, %c0_155] : memref<4x32xf32, #tpu.memory_space<vmem>>, vector<4x32xf32>
    tpu.vector_store %arg6[%c0_154, %c0_155], %409 {strides = array<i32>} : memref<4x32xf32, #tpu.memory_space<vmem>>, vector<4x32xf32>,
    %411 = vector.broadcast %355 : vector<4x1xf32> to vector<4x32xf32>
    %412 = arith.mulf %411, %392 : vector<4x32xf32>
    %c5_156 = arith.constant 5 : index
    %c0_157 = arith.constant 0 : index
    %c0_158 = arith.constant 0 : index
    %413 = vector.load %arg4[%c5_156, %c0_157, %c0_158] : memref<8x4x32xf32, #tpu.memory_space<vmem>>, vector<1x4x32xf32>
    %414 = vector.shape_cast %413 : vector<1x4x32xf32> to vector<4x32xf32>
    %415 = vector.shape_cast %412 : vector<4x32xf32> to vector<1x4x32xf32>
    tpu.vector_store %arg4[%c5_156, %c0_157, %c0_158], %415 {strides = array<i32>} : memref<8x4x32xf32, #tpu.memory_space<vmem>>, vector<1x4x32xf32>,
    %c6_i32 = arith.constant 6 : i32
    %416 = arith.addi %7, %c6_i32 : i32
    %c15_i32_159 = arith.constant 15 : i32
    %417 = arith.subi %c15_i32_159, %416 : i32
    %418 = vector.broadcast %416 : i32 to vector<4x1xi32>
    %419 = vector.broadcast %417 : i32 to vector<4x1xi32>
    %420 = arith.select %5, %418, %419 : vector<4x1xi1>, vector<4x1xi32>
    %421 = arith.cmpi slt, %420, %6 : vector<4x1xi32>
    %422 = arith.extui %421 : vector<4x1xi1> to vector<4x1xi32>
    %423 = arith.sitofp %422 : vector<4x1xi32> to vector<4x1xf32>
    %c0_160 = arith.constant 0 : index
    %c0_161 = arith.constant 0 : index
    %424 = vector.load %arg5[%c0_160, %c0_161] : memref<4x32xf32, #tpu.memory_space<vmem>>, vector<4x32xf32>
    %c0_162 = arith.constant 0 : index
    %c0_163 = arith.constant 0 : index
    %425 = vector.load %arg3[%c0_162, %c0_163] : memref<32x256xf32, #tpu.memory_space<vmem>>, vector<32x256xf32>
    %cst_164 = arith.constant dense<0.000000e+00> : vector<4x256xf32>
    %426 = tpu.matmul %424, %425, %cst_164 {dimension_numbers = #tpu.dot_dimension_numbers<[1], [0], [0], [1], [0, 0, 1, 1], [], []>} : vector<4x32xf32>, vector<32x256xf32>, vector<4x256xf32> -> vector<4x256xf32>
    %427 = vector.extract_strided_slice %426 {offsets = [0, 0], sizes = [4, 128], strides = [1, 1]} : vector<4x256xf32> to vector<4x128xf32>
    %428 = vector.extract_strided_slice %426 {offsets = [0, 128], sizes = [4, 128], strides = [1, 1]} : vector<4x256xf32> to vector<4x128xf32>
    %429 = vector.shape_cast %5 : vector<4x1xi1> to vector<4x1xi1>
    %430 = vector.broadcast %429 : vector<4x1xi1> to vector<4x128xi1>
    %431 = arith.select %430, %427, %428 : vector<4x128xi1>, vector<4x128xf32>
    %c6 = arith.constant 6 : index
    %c0_165 = arith.constant 0 : index
    %c0_166 = arith.constant 0 : index
    %432 = vector.load %arg2[%c6, %c0_165, %c0_166] : memref<8x4x128xf32, #tpu.memory_space<vmem>>, vector<1x4x128xf32>
    %433 = vector.shape_cast %432 : vector<1x4x128xf32> to vector<4x128xf32>
    %434 = arith.addf %433, %431 : vector<4x128xf32>
    %435 = vector.extract_strided_slice %434 {offsets = [0, 0], sizes = [4, 32], strides = [1, 1]} : vector<4x128xf32> to vector<4x32xf32>
    %436 = arith.negf %435 : vector<4x32xf32>
    %437 = math.exp %436 : vector<4x32xf32>
    %cst_167 = arith.constant 1.000000e+00 : f32
    %438 = vector.broadcast %cst_167 : f32 to vector<4x32xf32>
    %439 = arith.addf %438, %437 : vector<4x32xf32>
    %440 = arith.divf %438, %439 : vector<4x32xf32>
    %441 = vector.extract_strided_slice %434 {offsets = [0, 32], sizes = [4, 32], strides = [1, 1]} : vector<4x128xf32> to vector<4x32xf32>
    %442 = arith.negf %441 : vector<4x32xf32>
    %443 = math.exp %442 : vector<4x32xf32>
    %cst_168 = arith.constant 1.000000e+00 : f32
    %444 = vector.broadcast %cst_168 : f32 to vector<4x32xf32>
    %445 = arith.addf %444, %443 : vector<4x32xf32>
    %446 = arith.divf %444, %445 : vector<4x32xf32>
    %447 = vector.extract_strided_slice %434 {offsets = [0, 64], sizes = [4, 32], strides = [1, 1]} : vector<4x128xf32> to vector<4x32xf32>
    %448 = math.tanh %447 : vector<4x32xf32>
    %449 = vector.extract_strided_slice %434 {offsets = [0, 96], sizes = [4, 32], strides = [1, 1]} : vector<4x128xf32> to vector<4x32xf32>
    %450 = arith.negf %449 : vector<4x32xf32>
    %451 = math.exp %450 : vector<4x32xf32>
    %cst_169 = arith.constant 1.000000e+00 : f32
    %452 = vector.broadcast %cst_169 : f32 to vector<4x32xf32>
    %453 = arith.addf %452, %451 : vector<4x32xf32>
    %454 = arith.divf %452, %453 : vector<4x32xf32>
    %c0_170 = arith.constant 0 : index
    %c0_171 = arith.constant 0 : index
    %455 = vector.load %arg6[%c0_170, %c0_171] : memref<4x32xf32, #tpu.memory_space<vmem>>, vector<4x32xf32>
    %456 = arith.mulf %446, %455 : vector<4x32xf32>
    %457 = arith.mulf %440, %448 : vector<4x32xf32>
    %458 = arith.addf %456, %457 : vector<4x32xf32>
    %459 = math.tanh %458 : vector<4x32xf32>
    %460 = arith.mulf %454, %459 : vector<4x32xf32>
    %461 = vector.broadcast %423 : vector<4x1xf32> to vector<4x32xf32>
    %462 = arith.mulf %461, %460 : vector<4x32xf32>
    %cst_172 = arith.constant 1.000000e+00 : f32
    %463 = vector.broadcast %cst_172 : f32 to vector<4x1xf32>
    %464 = arith.subf %463, %423 : vector<4x1xf32>
    %c0_173 = arith.constant 0 : index
    %c0_174 = arith.constant 0 : index
    %465 = vector.load %arg5[%c0_173, %c0_174] : memref<4x32xf32, #tpu.memory_space<vmem>>, vector<4x32xf32>
    %466 = vector.broadcast %464 : vector<4x1xf32> to vector<4x32xf32>
    %467 = arith.mulf %466, %465 : vector<4x32xf32>
    %468 = arith.addf %462, %467 : vector<4x32xf32>
    %c0_175 = arith.constant 0 : index
    %c0_176 = arith.constant 0 : index
    %469 = vector.load %arg5[%c0_175, %c0_176] : memref<4x32xf32, #tpu.memory_space<vmem>>, vector<4x32xf32>
    tpu.vector_store %arg5[%c0_175, %c0_176], %468 {strides = array<i32>} : memref<4x32xf32, #tpu.memory_space<vmem>>, vector<4x32xf32>,
    %470 = vector.broadcast %423 : vector<4x1xf32> to vector<4x32xf32>
    %471 = arith.mulf %470, %458 : vector<4x32xf32>
    %cst_177 = arith.constant 1.000000e+00 : f32
    %472 = vector.broadcast %cst_177 : f32 to vector<4x1xf32>
    %473 = arith.subf %472, %423 : vector<4x1xf32>
    %c0_178 = arith.constant 0 : index
    %c0_179 = arith.constant 0 : index
    %474 = vector.load %arg6[%c0_178, %c0_179] : memref<4x32xf32, #tpu.memory_space<vmem>>, vector<4x32xf32>
    %475 = vector.broadcast %473 : vector<4x1xf32> to vector<4x32xf32>
    %476 = arith.mulf %475, %474 : vector<4x32xf32>
    %477 = arith.addf %471, %476 : vector<4x32xf32>
    %c0_180 = arith.constant 0 : index
    %c0_181 = arith.constant 0 : index
    %478 = vector.load %arg6[%c0_180, %c0_181] : memref<4x32xf32, #tpu.memory_space<vmem>>, vector<4x32xf32>
    tpu.vector_store %arg6[%c0_180, %c0_181], %477 {strides = array<i32>} : memref<4x32xf32, #tpu.memory_space<vmem>>, vector<4x32xf32>,
    %479 = vector.broadcast %423 : vector<4x1xf32> to vector<4x32xf32>
    %480 = arith.mulf %479, %460 : vector<4x32xf32>
    %c6_182 = arith.constant 6 : index
    %c0_183 = arith.constant 0 : index
    %c0_184 = arith.constant 0 : index
    %481 = vector.load %arg4[%c6_182, %c0_183, %c0_184] : memref<8x4x32xf32, #tpu.memory_space<vmem>>, vector<1x4x32xf32>
    %482 = vector.shape_cast %481 : vector<1x4x32xf32> to vector<4x32xf32>
    %483 = vector.shape_cast %480 : vector<4x32xf32> to vector<1x4x32xf32>
    tpu.vector_store %arg4[%c6_182, %c0_183, %c0_184], %483 {strides = array<i32>} : memref<8x4x32xf32, #tpu.memory_space<vmem>>, vector<1x4x32xf32>,
    %c7_i32 = arith.constant 7 : i32
    %484 = arith.addi %7, %c7_i32 : i32
    %c15_i32_185 = arith.constant 15 : i32
    %485 = arith.subi %c15_i32_185, %484 : i32
    %486 = vector.broadcast %484 : i32 to vector<4x1xi32>
    %487 = vector.broadcast %485 : i32 to vector<4x1xi32>
    %488 = arith.select %5, %486, %487 : vector<4x1xi1>, vector<4x1xi32>
    %489 = arith.cmpi slt, %488, %6 : vector<4x1xi32>
    %490 = arith.extui %489 : vector<4x1xi1> to vector<4x1xi32>
    %491 = arith.sitofp %490 : vector<4x1xi32> to vector<4x1xf32>
    %c0_186 = arith.constant 0 : index
    %c0_187 = arith.constant 0 : index
    %492 = vector.load %arg5[%c0_186, %c0_187] : memref<4x32xf32, #tpu.memory_space<vmem>>, vector<4x32xf32>
    %c0_188 = arith.constant 0 : index
    %c0_189 = arith.constant 0 : index
    %493 = vector.load %arg3[%c0_188, %c0_189] : memref<32x256xf32, #tpu.memory_space<vmem>>, vector<32x256xf32>
    %cst_190 = arith.constant dense<0.000000e+00> : vector<4x256xf32>
    %494 = tpu.matmul %492, %493, %cst_190 {dimension_numbers = #tpu.dot_dimension_numbers<[1], [0], [0], [1], [0, 0, 1, 1], [], []>} : vector<4x32xf32>, vector<32x256xf32>, vector<4x256xf32> -> vector<4x256xf32>
    %495 = vector.extract_strided_slice %494 {offsets = [0, 0], sizes = [4, 128], strides = [1, 1]} : vector<4x256xf32> to vector<4x128xf32>
    %496 = vector.extract_strided_slice %494 {offsets = [0, 128], sizes = [4, 128], strides = [1, 1]} : vector<4x256xf32> to vector<4x128xf32>
    %497 = vector.shape_cast %5 : vector<4x1xi1> to vector<4x1xi1>
    %498 = vector.broadcast %497 : vector<4x1xi1> to vector<4x128xi1>
    %499 = arith.select %498, %495, %496 : vector<4x128xi1>, vector<4x128xf32>
    %c7 = arith.constant 7 : index
    %c0_191 = arith.constant 0 : index
    %c0_192 = arith.constant 0 : index
    %500 = vector.load %arg2[%c7, %c0_191, %c0_192] : memref<8x4x128xf32, #tpu.memory_space<vmem>>, vector<1x4x128xf32>
    %501 = vector.shape_cast %500 : vector<1x4x128xf32> to vector<4x128xf32>
    %502 = arith.addf %501, %499 : vector<4x128xf32>
    %503 = vector.extract_strided_slice %502 {offsets = [0, 0], sizes = [4, 32], strides = [1, 1]} : vector<4x128xf32> to vector<4x32xf32>
    %504 = arith.negf %503 : vector<4x32xf32>
    %505 = math.exp %504 : vector<4x32xf32>
    %cst_193 = arith.constant 1.000000e+00 : f32
    %506 = vector.broadcast %cst_193 : f32 to vector<4x32xf32>
    %507 = arith.addf %506, %505 : vector<4x32xf32>
    %508 = arith.divf %506, %507 : vector<4x32xf32>
    %509 = vector.extract_strided_slice %502 {offsets = [0, 32], sizes = [4, 32], strides = [1, 1]} : vector<4x128xf32> to vector<4x32xf32>
    %510 = arith.negf %509 : vector<4x32xf32>
    %511 = math.exp %510 : vector<4x32xf32>
    %cst_194 = arith.constant 1.000000e+00 : f32
    %512 = vector.broadcast %cst_194 : f32 to vector<4x32xf32>
    %513 = arith.addf %512, %511 : vector<4x32xf32>
    %514 = arith.divf %512, %513 : vector<4x32xf32>
    %515 = vector.extract_strided_slice %502 {offsets = [0, 64], sizes = [4, 32], strides = [1, 1]} : vector<4x128xf32> to vector<4x32xf32>
    %516 = math.tanh %515 : vector<4x32xf32>
    %517 = vector.extract_strided_slice %502 {offsets = [0, 96], sizes = [4, 32], strides = [1, 1]} : vector<4x128xf32> to vector<4x32xf32>
    %518 = arith.negf %517 : vector<4x32xf32>
    %519 = math.exp %518 : vector<4x32xf32>
    %cst_195 = arith.constant 1.000000e+00 : f32
    %520 = vector.broadcast %cst_195 : f32 to vector<4x32xf32>
    %521 = arith.addf %520, %519 : vector<4x32xf32>
    %522 = arith.divf %520, %521 : vector<4x32xf32>
    %c0_196 = arith.constant 0 : index
    %c0_197 = arith.constant 0 : index
    %523 = vector.load %arg6[%c0_196, %c0_197] : memref<4x32xf32, #tpu.memory_space<vmem>>, vector<4x32xf32>
    %524 = arith.mulf %514, %523 : vector<4x32xf32>
    %525 = arith.mulf %508, %516 : vector<4x32xf32>
    %526 = arith.addf %524, %525 : vector<4x32xf32>
    %527 = math.tanh %526 : vector<4x32xf32>
    %528 = arith.mulf %522, %527 : vector<4x32xf32>
    %529 = vector.broadcast %491 : vector<4x1xf32> to vector<4x32xf32>
    %530 = arith.mulf %529, %528 : vector<4x32xf32>
    %cst_198 = arith.constant 1.000000e+00 : f32
    %531 = vector.broadcast %cst_198 : f32 to vector<4x1xf32>
    %532 = arith.subf %531, %491 : vector<4x1xf32>
    %c0_199 = arith.constant 0 : index
    %c0_200 = arith.constant 0 : index
    %533 = vector.load %arg5[%c0_199, %c0_200] : memref<4x32xf32, #tpu.memory_space<vmem>>, vector<4x32xf32>
    %534 = vector.broadcast %532 : vector<4x1xf32> to vector<4x32xf32>
    %535 = arith.mulf %534, %533 : vector<4x32xf32>
    %536 = arith.addf %530, %535 : vector<4x32xf32>
    %c0_201 = arith.constant 0 : index
    %c0_202 = arith.constant 0 : index
    %537 = vector.load %arg5[%c0_201, %c0_202] : memref<4x32xf32, #tpu.memory_space<vmem>>, vector<4x32xf32>
    tpu.vector_store %arg5[%c0_201, %c0_202], %536 {strides = array<i32>} : memref<4x32xf32, #tpu.memory_space<vmem>>, vector<4x32xf32>,
    %538 = vector.broadcast %491 : vector<4x1xf32> to vector<4x32xf32>
    %539 = arith.mulf %538, %526 : vector<4x32xf32>
    %cst_203 = arith.constant 1.000000e+00 : f32
    %540 = vector.broadcast %cst_203 : f32 to vector<4x1xf32>
    %541 = arith.subf %540, %491 : vector<4x1xf32>
    %c0_204 = arith.constant 0 : index
    %c0_205 = arith.constant 0 : index
    %542 = vector.load %arg6[%c0_204, %c0_205] : memref<4x32xf32, #tpu.memory_space<vmem>>, vector<4x32xf32>
    %543 = vector.broadcast %541 : vector<4x1xf32> to vector<4x32xf32>
    %544 = arith.mulf %543, %542 : vector<4x32xf32>
    %545 = arith.addf %539, %544 : vector<4x32xf32>
    %c0_206 = arith.constant 0 : index
    %c0_207 = arith.constant 0 : index
    %546 = vector.load %arg6[%c0_206, %c0_207] : memref<4x32xf32, #tpu.memory_space<vmem>>, vector<4x32xf32>
    tpu.vector_store %arg6[%c0_206, %c0_207], %545 {strides = array<i32>} : memref<4x32xf32, #tpu.memory_space<vmem>>, vector<4x32xf32>,
    %547 = vector.broadcast %491 : vector<4x1xf32> to vector<4x32xf32>
    %548 = arith.mulf %547, %528 : vector<4x32xf32>
    %c7_208 = arith.constant 7 : index
    %c0_209 = arith.constant 0 : index
    %c0_210 = arith.constant 0 : index
    %549 = vector.load %arg4[%c7_208, %c0_209, %c0_210] : memref<8x4x32xf32, #tpu.memory_space<vmem>>, vector<1x4x32xf32>
    %550 = vector.shape_cast %549 : vector<1x4x32xf32> to vector<4x32xf32>
    %551 = vector.shape_cast %548 : vector<4x32xf32> to vector<1x4x32xf32>
    tpu.vector_store %arg4[%c7_208, %c0_209, %c0_210], %551 {strides = array<i32>} : memref<8x4x32xf32, #tpu.memory_space<vmem>>, vector<1x4x32xf32>,
    return
  }
  func.func @transform_0(%arg0: i32) -> (i32, i32) {
    %c0_i32 = arith.constant 0 : i32
    %c0_i32_0 = arith.constant 0 : i32
    %c0_i32_1 = arith.constant 0 : i32
    return %c0_i32, %c0_i32_0 : i32, i32
  }
  func.func @transform_1(%arg0: i32) -> (i32, i32, i32) {
    %c0_i32 = arith.constant 0 : i32
    %c0_i32_0 = arith.constant 0 : i32
    %c0_i32_1 = arith.constant 0 : i32
    return %arg0, %c0_i32, %c0_i32_0 : i32, i32, i32
  }
  func.func @transform_2(%arg0: i32) -> (i32, i32) {
    %c0_i32 = arith.constant 0 : i32
    %c0_i32_0 = arith.constant 0 : i32
    %c0_i32_1 = arith.constant 0 : i32
    return %c0_i32, %c0_i32_0 : i32, i32
  }
  func.func @transform_3(%arg0: i32) -> (i32, i32, i32) {
    %c0_i32 = arith.constant 0 : i32
    %c0_i32_0 = arith.constant 0 : i32
    %c0_i32_1 = arith.constant 0 : i32
    return %arg0, %c0_i32, %c0_i32_0 : i32, i32, i32
  }
}

</mosaic_0001>

<llo_original>
// kernel: tpu_custom_call.1
$region0: #{tpu_custom_call.1}
  #allocation0 [shape = 'u32[]', space=smem, size = 0x4, offset = 0x4, fixed_abs, tag = 'smem constant byte address 0x4 - core index']
  #allocation1 [shape = 'u32[144,128]{1,0:T(1,128)}', space=vmem, size = 0x12000, scoped, tag = 'internal scratch']
  #allocation2 [shape = 'f32[4,32]{1,0:T(4,128)}', space=vmem, size = 0x800, scoped, tag = 'scratch operand']
  #allocation3 [shape = 'f32[4,32]{1,0:T(4,128)}', space=vmem, size = 0x800, scoped, tag = 'scratch operand']
  %s0 = inlined_call_operand.vmem [shape: s32[4,1], index: 0, kind: input, shape index: {}]
  %s1 = inlined_call_operand.hbm [shape: f32[16,4,128], index: 1, kind: input, shape index: {}]
  %s2 = inlined_call_operand.hbm [shape: f32[32,256], index: 2, kind: input, shape index: {}]
  %s3 = inlined_call_operand.hbm [shape: f32[16,4,32], index: 3, kind: output, shape index: {}]
  %s4 = sld [smem:[#allocation0]]
  $region57: #{tpu_custom_call.1} parent=0
    _
  %s6 = ssub.s32 1, %s4
  %s7 = scalar_select 0, %s6, %s4
  $region1: #{tpu_custom_call.1} parent=0
    #allocation4 [shape = 'u8[32768]{0}', space=vmem, size = 0x8000, scoped, tag = 'input window, operand 1']
    #allocation5 [shape = 's32[2]{0}', space=sflag, size = 0x8, scoped, tag = 'scoped memory for tpu_custom_call.1']
    #allocation6 [shape = 's32[2]{0}', space=sflag, size = 0x8, scoped, tag = 'scoped memory for tpu_custom_call.1']
    #allocation7 [shape = 'u8[32768]{0}', space=vmem, size = 0x8000, scoped, tag = 'input window, operand 2, single buffered']
    #allocation8 [shape = 's32[1]{0}', space=sflag, size = 0x4, scoped, tag = 'scoped memory for tpu_custom_call.1']
    #allocation9 [shape = 'u8[32768]{0}', space=vmem, size = 0x8000, scoped, tag = 'output window, operand 0']
    %8 = vsyncpa [#allocation5], 0
    %s9 = scalar_lea.sflag [#allocation5], 1
    %10 = vsyncpa %s9, 0
    %11 = vsyncpa [#allocation8], 0
    %12 = vsyncpa [#allocation6], 0
    %s13 = scalar_lea.sflag [#allocation6], 1
    %14 = vsyncpa %s13, 0
    loop: start=0, step=1, limit=4
    $region2: #{tpu_custom_call.1} parent=1 // loop_pre_header
      _
    $region3: #{tpu_custom_call.1} parent=1 // loop_header
      %s16 = sphi 0, %s20
      %p17 = scmp.ge.s32.totalorder %s16, 4
      %s24 = sphi 0, %s24
      %s26 = sphi 0, %s24
      %s27 = sphi 0, %s26
      %s41 = sphi 0, %s27
      %s47 = sphi 0, %s49
      %s50 = sphi 0, %s47
      %s51 = sphi 0, %s50
      %s67 = sphi 0, %s51
      %s71 = sphi 0, %s71
      %s73 = sphi 0, %s71
      %s74 = sphi 0, %s73
      %s88 = sphi 0, %s74
      %s94 = sphi 0, %s96
      %s97 = sphi 0, %s94
      %s98 = sphi 0, %s97
      %s114 = sphi 0, %s98
    $region4: #{tpu_custom_call.1} parent=1 // loop_header_branch
      %19 = sbr.rel (%p17) target = $region8
    $region5: #{tpu_custom_call.1} parent=1 // loop_body
      %s21 = ssub.s32 %s16, 1
      %s22 = ssub.s32 %s16, 2
      %s23 = sadd.s32 %s16, 1
      %s25 = sadd.s32 %s24, 1
      %p28 = scmp.eq.s32.totalorder %s16, 1
      %p29 = scmp.ne.s32.totalorder %s24, %s26
      %p30 = scmp.eq.s32.totalorder %s16, 0
      %p31 = por %p29, %p30
      %p32 = scmp.ne.s32.totalorder %s24, %s26
      %p33 = scmp.eq.s32.totalorder %s21, 1
      %p34 = por %p32, %p33
      %p35 = scmp.ne.s32.totalorder %s26, %s27
      %p36 = scmp.eq.s32.totalorder %s21, 0
      %p37 = por %p35, %p36
      %p38 = scmp.ne.s32.totalorder %s26, %s27
      %p39 = scmp.eq.s32.totalorder %s22, 1
      %p40 = por %p38, %p39
      %p42 = scmp.ne.s32.totalorder %s27, %s41
      %p43 = scmp.eq.s32.totalorder %s22, 0
      %p44 = por %p42, %p43
      %s45 = ssub.s32 %s16, %s23
      %p46 = scmp.eq.s32.totalorder %s45, 0
      %s48 = sadd.s32 %s47, 1
      %s49 = scalar_select %p46, %s47, %s48
      %p52 = pneg %p46
      %p53 = scmp.eq.s32.totalorder %s16, 1
      %p54 = por %p52, %p53
      %p55 = scmp.ne.s32.totalorder %s47, %s50
      %p56 = scmp.eq.s32.totalorder %s16, 0
      %p57 = por %p55, %p56
      %p58 = scmp.ne.s32.totalorder %s47, %s50
      %p59 = scmp.eq.s32.totalorder %s21, 1
      %p60 = por %p58, %p59
      %p61 = scmp.ne.s32.totalorder %s50, %s51
      %p62 = scmp.eq.s32.totalorder %s21, 0
      %p63 = por %p61, %p62
      %p64 = scmp.ne.s32.totalorder %s50, %s51
      %p65 = scmp.eq.s32.totalorder %s22, 1
      %p66 = por %p64, %p65
      %p68 = scmp.ne.s32.totalorder %s51, %s67
      %p69 = scmp.eq.s32.totalorder %s22, 0
      %p70 = por %p68, %p69
      %s72 = sadd.s32 %s71, 1
      %p75 = scmp.eq.s32.totalorder %s16, 1
      %p76 = scmp.ne.s32.totalorder %s71, %s73
      %p77 = scmp.eq.s32.totalorder %s16, 0
      %p78 = por %p76, %p77
      %p79 = scmp.ne.s32.totalorder %s71, %s73
      %p80 = scmp.eq.s32.totalorder %s21, 1
      %p81 = por %p79, %p80
      %p82 = scmp.ne.s32.totalorder %s73, %s74
      %p83 = scmp.eq.s32.totalorder %s21, 0
      %p84 = por %p82, %p83
      %p85 = scmp.ne.s32.totalorder %s73, %s74
      %p86 = scmp.eq.s32.totalorder %s22, 1
      %p87 = por %p85, %p86
      %p89 = scmp.ne.s32.totalorder %s74, %s88
      %p90 = scmp.eq.s32.totalorder %s22, 0
      %p91 = por %p89, %p90
      %s92 = ssub.s32 %s16, %s23
      %p93 = scmp.eq.s32.totalorder %s92, 0
      %s95 = sadd.s32 %s94, 1
      %s96 = scalar_select %p93, %s94, %s95
      %p99 = pneg %p93
      %p100 = scmp.eq.s32.totalorder %s16, 1
      %p101 = por %p99, %p100
      %p102 = scmp.ne.s32.totalorder %s94, %s97
      %p103 = scmp.eq.s32.totalorder %s16, 0
      %p104 = por %p102, %p103
      %p105 = scmp.ne.s32.totalorder %s94, %s97
      %p106 = scmp.eq.s32.totalorder %s21, 1
      %p107 = por %p105, %p106
      %p108 = scmp.ne.s32.totalorder %s97, %s98
      %p109 = scmp.eq.s32.totalorder %s21, 0
      %p110 = por %p108, %p109
      %p111 = scmp.ne.s32.totalorder %s97, %s98
      %p112 = scmp.eq.s32.totalorder %s22, 1
      %p113 = por %p111, %p112
      %p115 = scmp.ne.s32.totalorder %s98, %s114
      %p116 = scmp.eq.s32.totalorder %s22, 0
      %p117 = por %p115, %p116
      %p118 = scmp.le.s32.totalorder 1, %s16
      %p119 = scmp.lt.s32.totalorder %s16, 3
      %p120 = pnand %p118, %p119
      %p121 = pneg %p120
      // Predicated region
      $region9: #{tpu_custom_call.1} parent=5 // pred_check
        _
      $region10: #{tpu_custom_call.1} parent=5 // pred_check_branch
        %123 = sbr.rel (%p120) target = $region12
      $region11: #{tpu_custom_call.1} parent=5 // pred_region
        %s124 = ssub.s32 %s16, 1
        // Predicated region
        $region13: #{tpu_custom_call.1} parent=11 // pred_check
          %p125 = pneg %p37
        $region14: #{tpu_custom_call.1} parent=11 // pred_check_branch
          %127 = sbr.rel (%p125) target = $region16
        $region15: #{tpu_custom_call.1} parent=11 // pred_region
          _
        $region16: #{tpu_custom_call.1} parent=11 // pred_fallthru
          _
        // Predicated region
        $region17: #{tpu_custom_call.1} parent=11 // pred_check
          %p128 = pneg %p84
        $region18: #{tpu_custom_call.1} parent=11 // pred_check_branch
          %130 = sbr.rel (%p128) target = $region20
        $region19: #{tpu_custom_call.1} parent=11 // pred_region
          %s132 = ssub.s32 1024, 1024
          %133 = vsyncadd [#allocation8], %s132
          %s134 = sshll.u32 [#allocation7], 4
          %s135 = int_to_ptr.vmem [resolvable:$true] %s134
          %140 = dma.hbm_to_vmem [thread:$0]  %s2, 1024, %s135, [#allocation8], 256, 256, 16
        $region20: #{tpu_custom_call.1} parent=11 // pred_fallthru
          _
      $region12: #{tpu_custom_call.1} parent=5 // pred_fallthru
        _
      %p141 = scmp.lt.s32.totalorder %s16, 2
      // Predicated region
      $region21: #{tpu_custom_call.1} parent=5 // pred_check
        %p142 = pneg %p141
      $region22: #{tpu_custom_call.1} parent=5 // pred_check_branch
        %144 = sbr.rel (%p142) target = $region24
      $region23: #{tpu_custom_call.1} parent=5 // pred_region
        // Predicated region
        $region25: #{tpu_custom_call.1} parent=23 // pred_check
          %p145 = pneg %p57
        $region26: #{tpu_custom_call.1} parent=23 // pred_check_branch
          %147 = sbr.rel (%p145) target = $region28
        $region27: #{tpu_custom_call.1} parent=23 // pred_region
          %s148 = sand.u32 %s47, 1
          %s149 = scalar_lea.sflag [#allocation5], %s148
          %s150 = sand.u32 %s47, 1
          %s151 = smul.addr %s150, 32
          %s152 = scalar_lea.vmem [#allocation4], %s151
          %s153 = smul.u32 8, %s16
          %s155 = ssub.s32 512, 512
          %156 = vsyncadd %s149, %s155
          %s157 = smul.addr %s153, 64
          %s158 = scalar_lea.hbm %s1, %s157
          %s159 = sshll.u32 %s152, 4
          %s160 = int_to_ptr.vmem [resolvable:$true] %s159
          %165 = dma.hbm_to_vmem [thread:$0]  %s158, 512, %s160, %s149, 64, 64, 4
        $region28: #{tpu_custom_call.1} parent=23 // pred_fallthru
          _
      $region24: #{tpu_custom_call.1} parent=5 // pred_fallthru
        _
      %p166 = scmp.le.s32.totalorder 1, %s16
      %p167 = scmp.lt.s32.totalorder %s16, 3
      %p168 = pnand %p166, %p167
      %p169 = pneg %p168
      // Predicated region
      $region29: #{tpu_custom_call.1} parent=5 // pred_check
        _
      $region30: #{tpu_custom_call.1} parent=5 // pred_check_branch
        %171 = sbr.rel (%p168) target = $region32
      $region31: #{tpu_custom_call.1} parent=5 // pred_region
        %s172 = ssub.s32 %s16, 1
        %s173 = sand.u32 %s50, 1
        %s174 = scalar_lea.sflag [#allocation5], %s173
        %s175 = sand.u32 %s50, 1
        %s176 = smul.addr %s175, 32
        %s177 = scalar_lea.vmem [#allocation4], %s176
        // Predicated region
        $region33: #{tpu_custom_call.1} parent=31 // pred_check
          %p178 = pneg %p63
        $region34: #{tpu_custom_call.1} parent=31 // pred_check_branch
          %180 = sbr.rel (%p178) target = $region36
        $region35: #{tpu_custom_call.1} parent=31 // pred_region
          %181 = dma.done %s174, 512
        $region36: #{tpu_custom_call.1} parent=31 // pred_fallthru
          _
        // Predicated region
        $region37: #{tpu_custom_call.1} parent=31 // pred_check
          %p182 = pneg %p84
        $region38: #{tpu_custom_call.1} parent=31 // pred_check_branch
          %184 = sbr.rel (%p182) target = $region40
        $region39: #{tpu_custom_call.1} parent=31 // pred_region
          %185 = dma.done [#allocation8], 1024
        $region40: #{tpu_custom_call.1} parent=31 // pred_fallthru
          _
        %p186 = pneg %p37
        %p187 = pneg %p34
        %s188 = sand.u32 %s50, 1
        %s189 = scalar_lea.sflag [#allocation5], %s188
        %s190 = sand.u32 %s50, 1
        %s191 = smul.addr %s190, 32
        %s192 = scalar_lea.vmem [#allocation4], %s191
        %p193 = pneg %p63
        %p194 = pneg %p60
        %p195 = pneg %p84
        %p196 = pneg %p81
        %p197 = pneg %p110
        %p198 = pneg %p107
        %s199 = sand.u32 %s97, 1
        %s200 = scalar_lea.sflag [#allocation6], %s199
        %s201 = sand.u32 %s97, 1
        %s202 = smul.addr %s201, 32
        %s203 = scalar_lea.vmem [#allocation9], %s202
        %s204 = smul.u32 8, %s21
        %s205 = smul.u32 8, %s21
        %p206 = scmp.eq.s32.totalorder %s21, 0
        // Predicated region
        $region41: #{tpu_custom_call.1} parent=31 // pred_check
          %p207 = pneg %p206
        $region42: #{tpu_custom_call.1} parent=31 // pred_check_branch
          %209 = sbr.rel (%p207) target = $region44
        $region43: #{tpu_custom_call.1} parent=31 // pred_region
          %vm210 = vcmask 257024
          %211 = vst.msk [vmem:[#allocation2] sm:$0xf] %vm210, 0.0
          %212 = vst.msk [vmem:[#allocation3] sm:$0xf] %vm210, 0.0
        $region44: #{tpu_custom_call.1} parent=31 // pred_fallthru
          _
        %v213 = vlaneseq
        %v214 = vshrl.u32 %v213, 7
        %vm215 = vcmp.lt.s32.totalorder %v214, 2
        %v216 = vld [vmem:[%s0] sm:$0xf]
        %s217 = smul.u32 %s21, 8
        %s218 = ssub.s32 15, %s217
        %v219 = vstv %s217
        %v220 = vstv %s218
        %v221 = vsel %vm215, %v219, %v220
        %vm222 = vcmp.lt.s32.totalorder %v221, %v216
        %v223 = vsel %vm222, 1, 0
        %v224 = vcvt.s32.f32 %v223
        %v225 = vld [vmem:[#allocation2] sm:$0xf]
        %v226 = vld [vmem:[#allocation7] sm:$0xff]
        %v227 = vld [vmem:[#allocation7 + $0x8] sm:$0xff]
        %v228 = vld [vmem:[#allocation7 + $0x10] sm:$0xff]
        %v229 = vld [vmem:[#allocation7 + $0x18] sm:$0xff]
        %v230 = vld [vmem:[#allocation7 + $0x20] sm:$0xff]
        %v231 = vld [vmem:[#allocation7 + $0x28] sm:$0xff]
        %v232 = vld [vmem:[#allocation7 + $0x30] sm:$0xff]
        %v233 = vld [vmem:[#allocation7 + $0x38] sm:$0xff]
        %vm234 = vcmask 261120
        %v236 = vsel %vm234, %v225, 0
        %238 = vmatprep.subr.mxu0 0.0
        %239 = vmatpush1.msra.mxu0 0.0
        %240 = vmatprep.subr.mxu0 0.0
        %241 = vmatpush1.msra.mxu0 0.0
        %242 = vmatprep.subr.mxu0 0.0
        %243 = vmatpush1.msra.mxu0 0.0
        %244 = vmatprep.subr.mxu0 0.0
        %245 = vmatpush1.msra.mxu0 0.0
        %246 = vmatprep.subr.mxu0 0.0
        %247 = vmatpush1.msra.mxu0 0.0
        %248 = vmatprep.subr.mxu0 0.0
        %249 = vmatpush1.msra.mxu0 0.0
        %250 = vmatprep.subr.mxu0 0.0
        %251 = vmatpush1.msra.mxu0 0.0
        %252 = vmatprep.subr.mxu0 0.0
        %253 = vmatpush1.msra.mxu0 0.0
        %254 = vmatprep.subr.mxu0 0.0
        %255 = vmatpush1.msra.mxu0 0.0
        %256 = vmatprep.subr.mxu0 0.0
        %257 = vmatpush1.msra.mxu0 0.0
        %258 = vmatprep.subr.mxu0 0.0
        %259 = vmatpush1.msra.mxu0 0.0
        %260 = vmatprep.subr.mxu0 0.0
        %261 = vmatpush1.msra.mxu0 0.0
        %262 = vmatprep.subr.mxu0 %v233
        %263 = vmatpush1.msra.mxu0 %v232
        %264 = vmatprep.subr.mxu0 %v231
        %265 = vmatpush1.msra.mxu0 %v230
        %266 = vmatprep.subr.mxu0 %v229
        %267 = vmatpush1.msra.mxu0 %v228
        %268 = vmatprep.subr.mxu0 %v227
        %269 = vmatpush1.msra.mxu0 %v226
        %270 = vmatprep.subr.mxu0 0.0
        %271 = vmatpush2.msra.mxu0 0.0
        %272 = vmatprep.subr.mxu0 0.0
        %273 = vmatpush2.msra.mxu0 0.0
        %274 = vmatprep.subr.mxu0 0.0
        %275 = vmatpush2.msra.mxu0 0.0
        %276 = vmatprep.subr.mxu0 0.0
        %277 = vmatpush2.msra.mxu0 0.0
        %278 = vmatprep.subr.mxu0 0.0
        %279 = vmatpush2.msra.mxu0 0.0
        %280 = vmatprep.subr.mxu0 0.0
        %281 = vmatpush2.msra.mxu0 0.0
        %282 = vmatprep.subr.mxu0 0.0
        %283 = vmatpush2.msra.mxu0 0.0
        %284 = vmatprep.subr.mxu0 0.0
        %285 = vmatpush2.msra.mxu0 0.0
        %286 = vmatprep.subr.mxu0 0.0
        %287 = vmatpush2.msra.mxu0 0.0
        %288 = vmatprep.subr.mxu0 0.0
        %289 = vmatpush2.msra.mxu0 0.0
        %290 = vmatprep.subr.mxu0 0.0
        %291 = vmatpush2.msra.mxu0 0.0
        %292 = vmatprep.subr.mxu0 0.0
        %293 = vmatpush2.msra.mxu0 0.0
        %294 = vmatprep.subr.mxu0 0.0
        %295 = vmatpush2.msra.mxu0 0.0
        %296 = vmatprep.subr.mxu0 0.0
        %297 = vmatpush2.msra.mxu0 0.0
        %298 = vmatprep.subr.mxu0 0.0
        %299 = vmatpush2.msra.mxu0 0.0
        %300 = vmatprep.subr.mxu0 0.0
        %301 = vmatpush2.msra.mxu0 0.0
        %302 = vmatprep.mubr.f32.mxu0 0.0
        %303 = vmatmul.mubr.f32.gmra.mxu0 %v236
        %v304 = vpop.f32.mrf.mxu0
        %v305 = vadd.f32 0.0, %v304
        %v306 = vpop.f32.mrf.mxu0
        %v307 = vadd.f32 0.0, %v306
        %308 = vdwg.mxu0
        %v309 = vsel %vm215, 1, 0
        %vm310 = vcmp.eq.s32.totalorder %v309, 1
        %v311 = vsel %vm310, %v305, %v307
        %v312 = vld [vmem:[%s177] sm:$0xf]
        %v313 = vadd.f32 %v312, %v311
        %v314 = vxor.u32 %v313, 2147483648
        %v315 = vmul.f32 %v314, 1.442695
        %v316 = vpow.pop %v315
        %v317 = vadd.f32 %v316, 1.0
        %v318 = vrcp.pop %v317
        %v319 = vmul.f32 1.0, %v318
        %v320 = vtanh.pop %v313
        %v321 = vld [vmem:[#allocation3] sm:$0xf]
        %323 = vrot.lane.b32.xlu0 %v321, 32
        %v324 = vpop.permute.xlu0 %323
        %v326 = vmul.f32 %v319, %v324
        %328 = vrot.lane.b32.xlu0 %v320, 64
        %v329 = vpop.permute.xlu0 %328
        %v331 = vmul.f32 %v319, %v329
        %333 = vrot.lane.b32.xlu0 %v331, 32
        %v334 = vpop.permute.xlu0 %333
        %v336 = vadd.f32 %v326, %v334
        %v337 = vtanh.pop %v336
        %339 = vrot.lane.b32.xlu0 %v337, 64
        %v340 = vpop.permute.xlu0 %339
        %v342 = vmul.f32 %v319, %v340
        %344 = vset.pattern.permute.xlu0 0
        %345 = vperm.xlu0 %344, %v224
        %v346 = vpop.permute.xlu0 %345
        %v348 = vmul.f32 %v346, %v342
        %v349 = vsub.f32 1.0, %v224
        %351 = vset.pattern.permute.xlu0 0
        %352 = vperm.xlu0 %351, %v349
        %v353 = vpop.permute.xlu0 %352
        %v355 = vmul.f32 %v353, %v225
        %357 = vrot.lane.b32.xlu0 %v355, 96
        %v358 = vpop.permute.xlu0 %357
        %v360 = vadd.f32 %v348, %v358
        %362 = vrot.lane.b32.xlu0 %v360, 32
        %v363 = vpop.permute.xlu0 %362
        %vm365 = vcmask 257024
        %366 = vst.msk [vmem:[#allocation2] sm:$0xf] %vm365, %v363
        %v367 = vmul.f32 %v346, %v336
        %v368 = vld [vmem:[#allocation3] sm:$0xf]
        %v369 = vmul.f32 %v353, %v368
        %371 = vrot.lane.b32.xlu0 %v369, 32
        %v372 = vpop.permute.xlu0 %371
        %v374 = vadd.f32 %v367, %v372
        %376 = vrot.lane.b32.xlu0 %v374, 96
        %v377 = vpop.permute.xlu0 %376
        %379 = vst.msk [vmem:[#allocation3] sm:$0xf] %vm365, %v377
        %381 = vrot.lane.b32.xlu0 %v348, 32
        %v382 = vpop.permute.xlu0 %381
        %384 = vst.msk [vmem:[%s203] sm:$0xf] %vm365, %v382
        %s385 = sadd.s32 %s217, 1
        %s386 = ssub.s32 14, %s217
        %v387 = vstv %s385
        %v388 = vstv %s386
        %v389 = vsel %vm215, %v387, %v388
        %vm390 = vcmp.lt.s32.totalorder %v389, %v216
        %v391 = vsel %vm390, 1, 0
        %v392 = vcvt.s32.f32 %v391
        %v393 = vld [vmem:[#allocation2] sm:$0xf]
        %v394 = vld [vmem:[#allocation7] sm:$0xff]
        %v395 = vld [vmem:[#allocation7 + $0x8] sm:$0xff]
        %v396 = vld [vmem:[#allocation7 + $0x10] sm:$0xff]
        %v397 = vld [vmem:[#allocation7 + $0x18] sm:$0xff]
        %v398 = vld [vmem:[#allocation7 + $0x20] sm:$0xff]
        %v399 = vld [vmem:[#allocation7 + $0x28] sm:$0xff]
        %v400 = vld [vmem:[#allocation7 + $0x30] sm:$0xff]
        %v401 = vld [vmem:[#allocation7 + $0x38] sm:$0xff]
        %v403 = vsel %vm234, %v393, 0
        %405 = vmatprep.subr.mxu0 0.0
        %406 = vmatpush1.msra.mxu0 0.0
        %407 = vmatprep.subr.mxu0 0.0
        %408 = vmatpush1.msra.mxu0 0.0
        %409 = vmatprep.subr.mxu0 0.0
        %410 = vmatpush1.msra.mxu0 0.0
        %411 = vmatprep.subr.mxu0 0.0
        %412 = vmatpush1.msra.mxu0 0.0
        %413 = vmatprep.subr.mxu0 0.0
        %414 = vmatpush1.msra.mxu0 0.0
        %415 = vmatprep.subr.mxu0 0.0
        %416 = vmatpush1.msra.mxu0 0.0
        %417 = vmatprep.subr.mxu0 0.0
        %418 = vmatpush1.msra.mxu0 0.0
        %419 = vmatprep.subr.mxu0 0.0
        %420 = vmatpush1.msra.mxu0 0.0
        %421 = vmatprep.subr.mxu0 0.0
        %422 = vmatpush1.msra.mxu0 0.0
        %423 = vmatprep.subr.mxu0 0.0
        %424 = vmatpush1.msra.mxu0 0.0
        %425 = vmatprep.subr.mxu0 0.0
        %426 = vmatpush1.msra.mxu0 0.0
        %427 = vmatprep.subr.mxu0 0.0
        %428 = vmatpush1.msra.mxu0 0.0
        %429 = vmatprep.subr.mxu0 %v401
        %430 = vmatpush1.msra.mxu0 %v400
        %431 = vmatprep.subr.mxu0 %v399
        %432 = vmatpush1.msra.mxu0 %v398
        %433 = vmatprep.subr.mxu0 %v397
        %434 = vmatpush1.msra.mxu0 %v396
        %435 = vmatprep.subr.mxu0 %v395
        %436 = vmatpush1.msra.mxu0 %v394
        %437 = vmatprep.subr.mxu0 0.0
        %438 = vmatpush2.msra.mxu0 0.0
        %439 = vmatprep.subr.mxu0 0.0
        %440 = vmatpush2.msra.mxu0 0.0
        %441 = vmatprep.subr.mxu0 0.0
        %442 = vmatpush2.msra.mxu0 0.0
        %443 = vmatprep.subr.mxu0 0.0
        %444 = vmatpush2.msra.mxu0 0.0
        %445 = vmatprep.subr.mxu0 0.0
        %446 = vmatpush2.msra.mxu0 0.0
        %447 = vmatprep.subr.mxu0 0.0
        %448 = vmatpush2.msra.mxu0 0.0
        %449 = vmatprep.subr.mxu0 0.0
        %450 = vmatpush2.msra.mxu0 0.0
        %451 = vmatprep.subr.mxu0 0.0
        %452 = vmatpush2.msra.mxu0 0.0
        %453 = vmatprep.subr.mxu0 0.0
        %454 = vmatpush2.msra.mxu0 0.0
        %455 = vmatprep.subr.mxu0 0.0
        %456 = vmatpush2.msra.mxu0 0.0
        %457 = vmatprep.subr.mxu0 0.0
        %458 = vmatpush2.msra.mxu0 0.0
        %459 = vmatprep.subr.mxu0 0.0
        %460 = vmatpush2.msra.mxu0 0.0
        %461 = vmatprep.subr.mxu0 0.0
        %462 = vmatpush2.msra.mxu0 0.0
        %463 = vmatprep.subr.mxu0 0.0
        %464 = vmatpush2.msra.mxu0 0.0
        %465 = vmatprep.subr.mxu0 0.0
        %466 = vmatpush2.msra.mxu0 0.0
        %467 = vmatprep.subr.mxu0 0.0
        %468 = vmatpush2.msra.mxu0 0.0
        %469 = vmatprep.mubr.f32.mxu0 0.0
        %470 = vmatmul.mubr.f32.gmra.mxu0 %v403
        %v471 = vpop.f32.mrf.mxu0
        %v472 = vadd.f32 0.0, %v471
        %v473 = vpop.f32.mrf.mxu0
        %v474 = vadd.f32 0.0, %v473
        %475 = vdwg.mxu0
        %v476 = vsel %vm310, %v472, %v474
        %s477 = scalar_lea.vmem %s177, 4 [#allocation4]
        %v478 = vld [vmem:[%s477] sm:$0xf]
        %v479 = vadd.f32 %v478, %v476
        %v480 = vxor.u32 %v479, 2147483648
        %v481 = vmul.f32 %v480, 1.442695
        %v482 = vpow.pop %v481
        %v483 = vadd.f32 %v482, 1.0
        %v484 = vrcp.pop %v483
        %v485 = vmul.f32 1.0, %v484
        %v486 = vtanh.pop %v479
        %v487 = vld [vmem:[#allocation3] sm:$0xf]
        %489 = vrot.lane.b32.xlu0 %v487, 32
        %v490 = vpop.permute.xlu0 %489
        %v492 = vmul.f32 %v485, %v490
        %494 = vrot.lane.b32.xlu0 %v486, 64
        %v495 = vpop.permute.xlu0 %494
        %v497 = vmul.f32 %v485, %v495
        %499 = vrot.lane.b32.xlu0 %v497, 32
        %v500 = vpop.permute.xlu0 %499
        %v502 = vadd.f32 %v492, %v500
        %v503 = vtanh.pop %v502
        %505 = vrot.lane.b32.xlu0 %v503, 64
        %v506 = vpop.permute.xlu0 %505
        %v508 = vmul.f32 %v485, %v506
        %510 = vset.pattern.permute.xlu0 0
        %511 = vperm.xlu0 %510, %v392
        %v512 = vpop.permute.xlu0 %511
        %v514 = vmul.f32 %v512, %v508
        %v515 = vsub.f32 1.0, %v392
        %517 = vset.pattern.permute.xlu0 0
        %518 = vperm.xlu0 %517, %v515
        %v519 = vpop.permute.xlu0 %518
        %v521 = vmul.f32 %v519, %v393
        %523 = vrot.lane.b32.xlu0 %v521, 96
        %v524 = vpop.permute.xlu0 %523
        %v526 = vadd.f32 %v514, %v524
        %528 = vrot.lane.b32.xlu0 %v526, 32
        %v529 = vpop.permute.xlu0 %528
        %531 = vst.msk [vmem:[#allocation2] sm:$0xf] %vm365, %v529
        %v532 = vmul.f32 %v512, %v502
        %v533 = vld [vmem:[#allocation3] sm:$0xf]
        %v534 = vmul.f32 %v519, %v533
        %536 = vrot.lane.b32.xlu0 %v534, 32
        %v537 = vpop.permute.xlu0 %536
        %v539 = vadd.f32 %v532, %v537
        %541 = vrot.lane.b32.xlu0 %v539, 96
        %v542 = vpop.permute.xlu0 %541
        %544 = vst.msk [vmem:[#allocation3] sm:$0xf] %vm365, %v542
        %546 = vrot.lane.b32.xlu0 %v514, 32
        %v547 = vpop.permute.xlu0 %546
        %s549 = scalar_lea.vmem %s203, 4 [#allocation9]
        %550 = vst.msk [vmem:[%s549] sm:$0xf] %vm365, %v547
        %s551 = sadd.s32 %s217, 2
        %s552 = ssub.s32 13, %s217
        %v553 = vstv %s551
        %v554 = vstv %s552
        %v555 = vsel %vm215, %v553, %v554
        %vm556 = vcmp.lt.s32.totalorder %v555, %v216
        %v557 = vsel %vm556, 1, 0
        %v558 = vcvt.s32.f32 %v557
        %v559 = vld [vmem:[#allocation2] sm:$0xf]
        %v560 = vld [vmem:[#allocation7] sm:$0xff]
        %v561 = vld [vmem:[#allocation7 + $0x8] sm:$0xff]
        %v562 = vld [vmem:[#allocation7 + $0x10] sm:$0xff]
        %v563 = vld [vmem:[#allocation7 + $0x18] sm:$0xff]
        %v564 = vld [vmem:[#allocation7 + $0x20] sm:$0xff]
        %v565 = vld [vmem:[#allocation7 + $0x28] sm:$0xff]
        %v566 = vld [vmem:[#allocation7 + $0x30] sm:$0xff]
        %v567 = vld [vmem:[#allocation7 + $0x38] sm:$0xff]
        %v569 = vsel %vm234, %v559, 0
        %571 = vmatprep.subr.mxu0 0.0
        %572 = vmatpush1.msra.mxu0 0.0
        %573 = vmatprep.subr.mxu0 0.0
        %574 = vmatpush1.msra.mxu0 0.0
        %575 = vmatprep.subr.mxu0 0.0
        %576 = vmatpush1.msra.mxu0 0.0
        %577 = vmatprep.subr.mxu0 0.0
        %578 = vmatpush1.msra.mxu0 0.0
        %579 = vmatprep.subr.mxu0 0.0
        %580 = vmatpush1.msra.mxu0 0.0
        %581 = vmatprep.subr.mxu0 0.0
        %582 = vmatpush1.msra.mxu0 0.0
        %583 = vmatprep.subr.mxu0 0.0
        %584 = vmatpush1.msra.mxu0 0.0
        %585 = vmatprep.subr.mxu0 0.0
        %586 = vmatpush1.msra.mxu0 0.0
        %587 = vmatprep.subr.mxu0 0.0
        %588 = vmatpush1.msra.mxu0 0.0
        %589 = vmatprep.subr.mxu0 0.0
        %590 = vmatpush1.msra.mxu0 0.0
        %591 = vmatprep.subr.mxu0 0.0
        %592 = vmatpush1.msra.mxu0 0.0
        %593 = vmatprep.subr.mxu0 0.0
        %594 = vmatpush1.msra.mxu0 0.0
        %595 = vmatprep.subr.mxu0 %v567
        %596 = vmatpush1.msra.mxu0 %v566
        %597 = vmatprep.subr.mxu0 %v565
        %598 = vmatpush1.msra.mxu0 %v564
        %599 = vmatprep.subr.mxu0 %v563
        %600 = vmatpush1.msra.mxu0 %v562
        %601 = vmatprep.subr.mxu0 %v561
        %602 = vmatpush1.msra.mxu0 %v560
        %603 = vmatprep.subr.mxu0 0.0
        %604 = vmatpush2.msra.mxu0 0.0
        %605 = vmatprep.subr.mxu0 0.0
        %606 = vmatpush2.msra.mxu0 0.0
        %607 = vmatprep.subr.mxu0 0.0
        %608 = vmatpush2.msra.mxu0 0.0
        %609 = vmatprep.subr.mxu0 0.0
        %610 = vmatpush2.msra.mxu0 0.0
        %611 = vmatprep.subr.mxu0 0.0
        %612 = vmatpush2.msra.mxu0 0.0
        %613 = vmatprep.subr.mxu0 0.0
        %614 = vmatpush2.msra.mxu0 0.0
        %615 = vmatprep.subr.mxu0 0.0
        %616 = vmatpush2.msra.mxu0 0.0
        %617 = vmatprep.subr.mxu0 0.0
        %618 = vmatpush2.msra.mxu0 0.0
        %619 = vmatprep.subr.mxu0 0.0
        %620 = vmatpush2.msra.mxu0 0.0
        %621 = vmatprep.subr.mxu0 0.0
        %622 = vmatpush2.msra.mxu0 0.0
        %623 = vmatprep.subr.mxu0 0.0
        %624 = vmatpush2.msra.mxu0 0.0
        %625 = vmatprep.subr.mxu0 0.0
        %626 = vmatpush2.msra.mxu0 0.0
        %627 = vmatprep.subr.mxu0 0.0
        %628 = vmatpush2.msra.mxu0 0.0
        %629 = vmatprep.subr.mxu0 0.0
        %630 = vmatpush2.msra.mxu0 0.0
        %631 = vmatprep.subr.mxu0 0.0
        %632 = vmatpush2.msra.mxu0 0.0
        %633 = vmatprep.subr.mxu0 0.0
        %634 = vmatpush2.msra.mxu0 0.0
        %635 = vmatprep.mubr.f32.mxu0 0.0
        %636 = vmatmul.mubr.f32.gmra.mxu0 %v569
        %v637 = vpop.f32.mrf.mxu0
        %v638 = vadd.f32 0.0, %v637
        %v639 = vpop.f32.mrf.mxu0
        %v640 = vadd.f32 0.0, %v639
        %641 = vdwg.mxu0
        %v642 = vsel %vm310, %v638, %v640
        %s643 = scalar_lea.vmem %s177, 8 [#allocation4]
        %v644 = vld [vmem:[%s643] sm:$0xf]
        %v645 = vadd.f32 %v644, %v642
        %v646 = vxor.u32 %v645, 2147483648
        %v647 = vmul.f32 %v646, 1.442695
        %v648 = vpow.pop %v647
        %v649 = vadd.f32 %v648, 1.0
        %v650 = vrcp.pop %v649
        %v651 = vmul.f32 1.0, %v650
        %v652 = vtanh.pop %v645
        %v653 = vld [vmem:[#allocation3] sm:$0xf]
        %655 = vrot.lane.b32.xlu0 %v653, 32
        %v656 = vpop.permute.xlu0 %655
        %v658 = vmul.f32 %v651, %v656
        %660 = vrot.lane.b32.xlu0 %v652, 64
        %v661 = vpop.permute.xlu0 %660
        %v663 = vmul.f32 %v651, %v661
        %665 = vrot.lane.b32.xlu0 %v663, 32
        %v666 = vpop.permute.xlu0 %665
        %v668 = vadd.f32 %v658, %v666
        %v669 = vtanh.pop %v668
        %671 = vrot.lane.b32.xlu0 %v669, 64
        %v672 = vpop.permute.xlu0 %671
        %v674 = vmul.f32 %v651, %v672
        %676 = vset.pattern.permute.xlu0 0
        %677 = vperm.xlu0 %676, %v558
        %v678 = vpop.permute.xlu0 %677
        %v680 = vmul.f32 %v678, %v674
        %v681 = vsub.f32 1.0, %v558
        %683 = vset.pattern.permute.xlu0 0
        %684 = vperm.xlu0 %683, %v681
        %v685 = vpop.permute.xlu0 %684
        %v687 = vmul.f32 %v685, %v559
        %689 = vrot.lane.b32.xlu0 %v687, 96
        %v690 = vpop.permute.xlu0 %689
        %v692 = vadd.f32 %v680, %v690
        %694 = vrot.lane.b32.xlu0 %v692, 32
        %v695 = vpop.permute.xlu0 %694
        %697 = vst.msk [vmem:[#allocation2] sm:$0xf] %vm365, %v695
        %v698 = vmul.f32 %v678, %v668
        %v699 = vld [vmem:[#allocation3] sm:$0xf]
        %v700 = vmul.f32 %v685, %v699
        %702 = vrot.lane.b32.xlu0 %v700, 32
        %v703 = vpop.permute.xlu0 %702
        %v705 = vadd.f32 %v698, %v703
        %707 = vrot.lane.b32.xlu0 %v705, 96
        %v708 = vpop.permute.xlu0 %707
        %710 = vst.msk [vmem:[#allocation3] sm:$0xf] %vm365, %v708
        %712 = vrot.lane.b32.xlu0 %v680, 32
        %v713 = vpop.permute.xlu0 %712
        %s715 = scalar_lea.vmem %s203, 8 [#allocation9]
        %716 = vst.msk [vmem:[%s715] sm:$0xf] %vm365, %v713
        %s717 = sadd.s32 %s217, 3
        %s718 = ssub.s32 12, %s217
        %v719 = vstv %s717
        %v720 = vstv %s718
        %v721 = vsel %vm215, %v719, %v720
        %vm722 = vcmp.lt.s32.totalorder %v721, %v216
        %v723 = vsel %vm722, 1, 0
        %v724 = vcvt.s32.f32 %v723
        %v725 = vld [vmem:[#allocation2] sm:$0xf]
        %v726 = vld [vmem:[#allocation7] sm:$0xff]
        %v727 = vld [vmem:[#allocation7 + $0x8] sm:$0xff]
        %v728 = vld [vmem:[#allocation7 + $0x10] sm:$0xff]
        %v729 = vld [vmem:[#allocation7 + $0x18] sm:$0xff]
        %v730 = vld [vmem:[#allocation7 + $0x20] sm:$0xff]
        %v731 = vld [vmem:[#allocation7 + $0x28] sm:$0xff]
        %v732 = vld [vmem:[#allocation7 + $0x30] sm:$0xff]
        %v733 = vld [vmem:[#allocation7 + $0x38] sm:$0xff]
        %v735 = vsel %vm234, %v725, 0
        %737 = vmatprep.subr.mxu0 0.0
        %738 = vmatpush1.msra.mxu0 0.0
        %739 = vmatprep.subr.mxu0 0.0
        %740 = vmatpush1.msra.mxu0 0.0
        %741 = vmatprep.subr.mxu0 0.0
        %742 = vmatpush1.msra.mxu0 0.0
        %743 = vmatprep.subr.mxu0 0.0
        %744 = vmatpush1.msra.mxu0 0.0
        %745 = vmatprep.subr.mxu0 0.0
        %746 = vmatpush1.msra.mxu0 0.0
        %747 = vmatprep.subr.mxu0 0.0
        %748 = vmatpush1.msra.mxu0 0.0
        %749 = vmatprep.subr.mxu0 0.0
        %750 = vmatpush1.msra.mxu0 0.0
        %751 = vmatprep.subr.mxu0 0.0
        %752 = vmatpush1.msra.mxu0 0.0
        %753 = vmatprep.subr.mxu0 0.0
        %754 = vmatpush1.msra.mxu0 0.0
        %755 = vmatprep.subr.mxu0 0.0
        %756 = vmatpush1.msra.mxu0 0.0
        %757 = vmatprep.subr.mxu0 0.0
        %758 = vmatpush1.msra.mxu0 0.0
        %759 = vmatprep.subr.mxu0 0.0
        %760 = vmatpush1.msra.mxu0 0.0
        %761 = vmatprep.subr.mxu0 %v733
        %762 = vmatpush1.msra.mxu0 %v732
        %763 = vmatprep.subr.mxu0 %v731
        %764 = vmatpush1.msra.mxu0 %v730
        %765 = vmatprep.subr.mxu0 %v729
        %766 = vmatpush1.msra.mxu0 %v728
        %767 = vmatprep.subr.mxu0 %v727
        %768 = vmatpush1.msra.mxu0 %v726
        %769 = vmatprep.subr.mxu0 0.0
        %770 = vmatpush2.msra.mxu0 0.0
        %771 = vmatprep.subr.mxu0 0.0
        %772 = vmatpush2.msra.mxu0 0.0
        %773 = vmatprep.subr.mxu0 0.0
        %774 = vmatpush2.msra.mxu0 0.0
        %775 = vmatprep.subr.mxu0 0.0
        %776 = vmatpush2.msra.mxu0 0.0
        %777 = vmatprep.subr.mxu0 0.0
        %778 = vmatpush2.msra.mxu0 0.0
        %779 = vmatprep.subr.mxu0 0.0
        %780 = vmatpush2.msra.mxu0 0.0
        %781 = vmatprep.subr.mxu0 0.0
        %782 = vmatpush2.msra.mxu0 0.0
        %783 = vmatprep.subr.mxu0 0.0
        %784 = vmatpush2.msra.mxu0 0.0
        %785 = vmatprep.subr.mxu0 0.0
        %786 = vmatpush2.msra.mxu0 0.0
        %787 = vmatprep.subr.mxu0 0.0
        %788 = vmatpush2.msra.mxu0 0.0
        %789 = vmatprep.subr.mxu0 0.0
        %790 = vmatpush2.msra.mxu0 0.0
        %791 = vmatprep.subr.mxu0 0.0
        %792 = vmatpush2.msra.mxu0 0.0
        %793 = vmatprep.subr.mxu0 0.0
        %794 = vmatpush2.msra.mxu0 0.0
        %795 = vmatprep.subr.mxu0 0.0
        %796 = vmatpush2.msra.mxu0 0.0
        %797 = vmatprep.subr.mxu0 0.0
        %798 = vmatpush2.msra.mxu0 0.0
        %799 = vmatprep.subr.mxu0 0.0
        %800 = vmatpush2.msra.mxu0 0.0
        %801 = vmatprep.mubr.f32.mxu0 0.0
        %802 = vmatmul.mubr.f32.gmra.mxu0 %v735
        %v803 = vpop.f32.mrf.mxu0
        %v804 = vadd.f32 0.0, %v803
        %v805 = vpop.f32.mrf.mxu0
        %v806 = vadd.f32 0.0, %v805
        %807 = vdwg.mxu0
        %v808 = vsel %vm310, %v804, %v806
        %s809 = scalar_lea.vmem %s177, 12 [#allocation4]
        %v810 = vld [vmem:[%s809] sm:$0xf]
        %v811 = vadd.f32 %v810, %v808
        %v812 = vxor.u32 %v811, 2147483648
        %v813 = vmul.f32 %v812, 1.442695
        %v814 = vpow.pop %v813
        %v815 = vadd.f32 %v814, 1.0
        %v816 = vrcp.pop %v815
        %v817 = vmul.f32 1.0, %v816
        %v818 = vtanh.pop %v811
        %v819 = vld [vmem:[#allocation3] sm:$0xf]
        %821 = vrot.lane.b32.xlu0 %v819, 32
        %v822 = vpop.permute.xlu0 %821
        %v824 = vmul.f32 %v817, %v822
        %826 = vrot.lane.b32.xlu0 %v818, 64
        %v827 = vpop.permute.xlu0 %826
        %v829 = vmul.f32 %v817, %v827
        %831 = vrot.lane.b32.xlu0 %v829, 32
        %v832 = vpop.permute.xlu0 %831
        %v834 = vadd.f32 %v824, %v832
        %v835 = vtanh.pop %v834
        %837 = vrot.lane.b32.xlu0 %v835, 64
        %v838 = vpop.permute.xlu0 %837
        %v840 = vmul.f32 %v817, %v838
        %842 = vset.pattern.permute.xlu0 0
        %843 = vperm.xlu0 %842, %v724
        %v844 = vpop.permute.xlu0 %843
        %v846 = vmul.f32 %v844, %v840
        %v847 = vsub.f32 1.0, %v724
        %849 = vset.pattern.permute.xlu0 0
        %850 = vperm.xlu0 %849, %v847
        %v851 = vpop.permute.xlu0 %850
        %v853 = vmul.f32 %v851, %v725
        %855 = vrot.lane.b32.xlu0 %v853, 96
        %v856 = vpop.permute.xlu0 %855
        %v858 = vadd.f32 %v846, %v856
        %860 = vrot.lane.b32.xlu0 %v858, 32
        %v861 = vpop.permute.xlu0 %860
        %863 = vst.msk [vmem:[#allocation2] sm:$0xf] %vm365, %v861
        %v864 = vmul.f32 %v844, %v834
        %v865 = vld [vmem:[#allocation3] sm:$0xf]
        %v866 = vmul.f32 %v851, %v865
        %868 = vrot.lane.b32.xlu0 %v866, 32
        %v869 = vpop.permute.xlu0 %868
        %v871 = vadd.f32 %v864, %v869
        %873 = vrot.lane.b32.xlu0 %v871, 96
        %v874 = vpop.permute.xlu0 %873
        %876 = vst.msk [vmem:[#allocation3] sm:$0xf] %vm365, %v874
        %878 = vrot.lane.b32.xlu0 %v846, 32
        %v879 = vpop.permute.xlu0 %878
        %s881 = scalar_lea.vmem %s203, 12 [#allocation9]
        %882 = vst.msk [vmem:[%s881] sm:$0xf] %vm365, %v879
        %s883 = sadd.s32 %s217, 4
        %s884 = ssub.s32 11, %s217
        %v885 = vstv %s883
        %v886 = vstv %s884
        %v887 = vsel %vm215, %v885, %v886
        %vm888 = vcmp.lt.s32.totalorder %v887, %v216
        %v889 = vsel %vm888, 1, 0
        %v890 = vcvt.s32.f32 %v889
        %v891 = vld [vmem:[#allocation2] sm:$0xf]
        %v892 = vld [vmem:[#allocation7] sm:$0xff]
        %v893 = vld [vmem:[#allocation7 + $0x8] sm:$0xff]
        %v894 = vld [vmem:[#allocation7 + $0x10] sm:$0xff]
        %v895 = vld [vmem:[#allocation7 + $0x18] sm:$0xff]
        %v896 = vld [vmem:[#allocation7 + $0x20] sm:$0xff]
        %v897 = vld [vmem:[#allocation7 + $0x28] sm:$0xff]
        %v898 = vld [vmem:[#allocation7 + $0x30] sm:$0xff]
        %v899 = vld [vmem:[#allocation7 + $0x38] sm:$0xff]
        %v901 = vsel %vm234, %v891, 0
        %903 = vmatprep.subr.mxu0 0.0
        %904 = vmatpush1.msra.mxu0 0.0
        %905 = vmatprep.subr.mxu0 0.0
        %906 = vmatpush1.msra.mxu0 0.0
        %907 = vmatprep.subr.mxu0 0.0
        %908 = vmatpush1.msra.mxu0 0.0
        %909 = vmatprep.subr.mxu0 0.0
        %910 = vmatpush1.msra.mxu0 0.0
        %911 = vmatprep.subr.mxu0 0.0
        %912 = vmatpush1.msra.mxu0 0.0
        %913 = vmatprep.subr.mxu0 0.0
        %914 = vmatpush1.msra.mxu0 0.0
        %915 = vmatprep.subr.mxu0 0.0
        %916 = vmatpush1.msra.mxu0 0.0
        %917 = vmatprep.subr.mxu0 0.0
        %918 = vmatpush1.msra.mxu0 0.0
        %919 = vmatprep.subr.mxu0 0.0
        %920 = vmatpush1.msra.mxu0 0.0
        %921 = vmatprep.subr.mxu0 0.0
        %922 = vmatpush1.msra.mxu0 0.0
        %923 = vmatprep.subr.mxu0 0.0
        %924 = vmatpush1.msra.mxu0 0.0
        %925 = vmatprep.subr.mxu0 0.0
        %926 = vmatpush1.msra.mxu0 0.0
        %927 = vmatprep.subr.mxu0 %v899
        %928 = vmatpush1.msra.mxu0 %v898
        %929 = vmatprep.subr.mxu0 %v897
        %930 = vmatpush1.msra.mxu0 %v896
        %931 = vmatprep.subr.mxu0 %v895
        %932 = vmatpush1.msra.mxu0 %v894
        %933 = vmatprep.subr.mxu0 %v893
        %934 = vmatpush1.msra.mxu0 %v892
        %935 = vmatprep.subr.mxu0 0.0
        %936 = vmatpush2.msra.mxu0 0.0
        %937 = vmatprep.subr.mxu0 0.0
        %938 = vmatpush2.msra.mxu0 0.0
        %939 = vmatprep.subr.mxu0 0.0
        %940 = vmatpush2.msra.mxu0 0.0
        %941 = vmatprep.subr.mxu0 0.0
        %942 = vmatpush2.msra.mxu0 0.0
        %943 = vmatprep.subr.mxu0 0.0
        %944 = vmatpush2.msra.mxu0 0.0
        %945 = vmatprep.subr.mxu0 0.0
        %946 = vmatpush2.msra.mxu0 0.0
        %947 = vmatprep.subr.mxu0 0.0
        %948 = vmatpush2.msra.mxu0 0.0
        %949 = vmatprep.subr.mxu0 0.0
        %950 = vmatpush2.msra.mxu0 0.0
        %951 = vmatprep.subr.mxu0 0.0
        %952 = vmatpush2.msra.mxu0 0.0
        %953 = vmatprep.subr.mxu0 0.0
        %954 = vmatpush2.msra.mxu0 0.0
        %955 = vmatprep.subr.mxu0 0.0
        %956 = vmatpush2.msra.mxu0 0.0
        %957 = vmatprep.subr.mxu0 0.0
        %958 = vmatpush2.msra.mxu0 0.0
        %959 = vmatprep.subr.mxu0 0.0
        %960 = vmatpush2.msra.mxu0 0.0
        %961 = vmatprep.subr.mxu0 0.0
        %962 = vmatpush2.msra.mxu0 0.0
        %963 = vmatprep.subr.mxu0 0.0
        %964 = vmatpush2.msra.mxu0 0.0
        %965 = vmatprep.subr.mxu0 0.0
        %966 = vmatpush2.msra.mxu0 0.0
        %967 = vmatprep.mubr.f32.mxu0 0.0
        %968 = vmatmul.mubr.f32.gmra.mxu0 %v901
        %v969 = vpop.f32.mrf.mxu0
        %v970 = vadd.f32 0.0, %v969
        %v971 = vpop.f32.mrf.mxu0
        %v972 = vadd.f32 0.0, %v971
        %973 = vdwg.mxu0
        %v974 = vsel %vm310, %v970, %v972
        %s975 = scalar_lea.vmem %s177, 16 [#allocation4]
        %v976 = vld [vmem:[%s975] sm:$0xf]
        %v977 = vadd.f32 %v976, %v974
        %v978 = vxor.u32 %v977, 2147483648
        %v979 = vmul.f32 %v978, 1.442695
        %v980 = vpow.pop %v979
        %v981 = vadd.f32 %v980, 1.0
        %v982 = vrcp.pop %v981
        %v983 = vmul.f32 1.0, %v982
        %v984 = vtanh.pop %v977
        %v985 = vld [vmem:[#allocation3] sm:$0xf]
        %987 = vrot.lane.b32.xlu0 %v985, 32
        %v988 = vpop.permute.xlu0 %987
        %v990 = vmul.f32 %v983, %v988
        %992 = vrot.lane.b32.xlu0 %v984, 64
        %v993 = vpop.permute.xlu0 %992
        %v995 = vmul.f32 %v983, %v993
        %997 = vrot.lane.b32.xlu0 %v995, 32
        %v998 = vpop.permute.xlu0 %997
        %v1000 = vadd.f32 %v990, %v998
        %v1001 = vtanh.pop %v1000
        %1003 = vrot.lane.b32.xlu0 %v1001, 64
        %v1004 = vpop.permute.xlu0 %1003
        %v1006 = vmul.f32 %v983, %v1004
        %1008 = vset.pattern.permute.xlu0 0
        %1009 = vperm.xlu0 %1008, %v890
        %v1010 = vpop.permute.xlu0 %1009
        %v1012 = vmul.f32 %v1010, %v1006
        %v1013 = vsub.f32 1.0, %v890
        %1015 = vset.pattern.permute.xlu0 0
        %1016 = vperm.xlu0 %1015, %v1013
        %v1017 = vpop.permute.xlu0 %1016
        %v1019 = vmul.f32 %v1017, %v891
        %1021 = vrot.lane.b32.xlu0 %v1019, 96
        %v1022 = vpop.permute.xlu0 %1021
        %v1024 = vadd.f32 %v1012, %v1022
        %1026 = vrot.lane.b32.xlu0 %v1024, 32
        %v1027 = vpop.permute.xlu0 %1026
        %1029 = vst.msk [vmem:[#allocation2] sm:$0xf] %vm365, %v1027
        %v1030 = vmul.f32 %v1010, %v1000
        %v1031 = vld [vmem:[#allocation3] sm:$0xf]
        %v1032 = vmul.f32 %v1017, %v1031
        %1034 = vrot.lane.b32.xlu0 %v1032, 32
        %v1035 = vpop.permute.xlu0 %1034
        %v1037 = vadd.f32 %v1030, %v1035
        %1039 = vrot.lane.b32.xlu0 %v1037, 96
        %v1040 = vpop.permute.xlu0 %1039
        %1042 = vst.msk [vmem:[#allocation3] sm:$0xf] %vm365, %v1040
        %1044 = vrot.lane.b32.xlu0 %v1012, 32
        %v1045 = vpop.permute.xlu0 %1044
        %s1047 = scalar_lea.vmem %s203, 16 [#allocation9]
        %1048 = vst.msk [vmem:[%s1047] sm:$0xf] %vm365, %v1045
        %s1049 = sadd.s32 %s217, 5
        %s1050 = ssub.s32 10, %s217
        %v1051 = vstv %s1049
        %v1052 = vstv %s1050
        %v1053 = vsel %vm215, %v1051, %v1052
        %vm1054 = vcmp.lt.s32.totalorder %v1053, %v216
        %v1055 = vsel %vm1054, 1, 0
        %v1056 = vcvt.s32.f32 %v1055
        %v1057 = vld [vmem:[#allocation2] sm:$0xf]
        %v1058 = vld [vmem:[#allocation7] sm:$0xff]
        %v1059 = vld [vmem:[#allocation7 + $0x8] sm:$0xff]
        %v1060 = vld [vmem:[#allocation7 + $0x10] sm:$0xff]
        %v1061 = vld [vmem:[#allocation7 + $0x18] sm:$0xff]
        %v1062 = vld [vmem:[#allocation7 + $0x20] sm:$0xff]
        %v1063 = vld [vmem:[#allocation7 + $0x28] sm:$0xff]
        %v1064 = vld [vmem:[#allocation7 + $0x30] sm:$0xff]
        %v1065 = vld [vmem:[#allocation7 + $0x38] sm:$0xff]
        %v1067 = vsel %vm234, %v1057, 0
        %1069 = vmatprep.subr.mxu0 0.0
        %1070 = vmatpush1.msra.mxu0 0.0
        %1071 = vmatprep.subr.mxu0 0.0
        %1072 = vmatpush1.msra.mxu0 0.0
        %1073 = vmatprep.subr.mxu0 0.0
        %1074 = vmatpush1.msra.mxu0 0.0
        %1075 = vmatprep.subr.mxu0 0.0
        %1076 = vmatpush1.msra.mxu0 0.0
        %1077 = vmatprep.subr.mxu0 0.0
        %1078 = vmatpush1.msra.mxu0 0.0
        %1079 = vmatprep.subr.mxu0 0.0
        %1080 = vmatpush1.msra.mxu0 0.0
        %1081 = vmatprep.subr.mxu0 0.0
        %1082 = vmatpush1.msra.mxu0 0.0
        %1083 = vmatprep.subr.mxu0 0.0
        %1084 = vmatpush1.msra.mxu0 0.0
        %1085 = vmatprep.subr.mxu0 0.0
        %1086 = vmatpush1.msra.mxu0 0.0
        %1087 = vmatprep.subr.mxu0 0.0
        %1088 = vmatpush1.msra.mxu0 0.0
        %1089 = vmatprep.subr.mxu0 0.0
        %1090 = vmatpush1.msra.mxu0 0.0
        %1091 = vmatprep.subr.mxu0 0.0
        %1092 = vmatpush1.msra.mxu0 0.0
        %1093 = vmatprep.subr.mxu0 %v1065
        %1094 = vmatpush1.msra.mxu0 %v1064
        %1095 = vmatprep.subr.mxu0 %v1063
        %1096 = vmatpush1.msra.mxu0 %v1062
        %1097 = vmatprep.subr.mxu0 %v1061
        %1098 = vmatpush1.msra.mxu0 %v1060
        %1099 = vmatprep.subr.mxu0 %v1059
        %1100 = vmatpush1.msra.mxu0 %v1058
        %1101 = vmatprep.subr.mxu0 0.0
        %1102 = vmatpush2.msra.mxu0 0.0
        %1103 = vmatprep.subr.mxu0 0.0
        %1104 = vmatpush2.msra.mxu0 0.0
        %1105 = vmatprep.subr.mxu0 0.0
        %1106 = vmatpush2.msra.mxu0 0.0
        %1107 = vmatprep.subr.mxu0 0.0
        %1108 = vmatpush2.msra.mxu0 0.0
        %1109 = vmatprep.subr.mxu0 0.0
        %1110 = vmatpush2.msra.mxu0 0.0
        %1111 = vmatprep.subr.mxu0 0.0
        %1112 = vmatpush2.msra.mxu0 0.0
        %1113 = vmatprep.subr.mxu0 0.0
        %1114 = vmatpush2.msra.mxu0 0.0
        %1115 = vmatprep.subr.mxu0 0.0
        %1116 = vmatpush2.msra.mxu0 0.0
        %1117 = vmatprep.subr.mxu0 0.0
        %1118 = vmatpush2.msra.mxu0 0.0
        %1119 = vmatprep.subr.mxu0 0.0
        %1120 = vmatpush2.msra.mxu0 0.0
        %1121 = vmatprep.subr.mxu0 0.0
        %1122 = vmatpush2.msra.mxu0 0.0
        %1123 = vmatprep.subr.mxu0 0.0
        %1124 = vmatpush2.msra.mxu0 0.0
        %1125 = vmatprep.subr.mxu0 0.0
        %1126 = vmatpush2.msra.mxu0 0.0
        %1127 = vmatprep.subr.mxu0 0.0
        %1128 = vmatpush2.msra.mxu0 0.0
        %1129 = vmatprep.subr.mxu0 0.0
        %1130 = vmatpush2.msra.mxu0 0.0
        %1131 = vmatprep.subr.mxu0 0.0
        %1132 = vmatpush2.msra.mxu0 0.0
        %1133 = vmatprep.mubr.f32.mxu0 0.0
        %1134 = vmatmul.mubr.f32.gmra.mxu0 %v1067
        %v1135 = vpop.f32.mrf.mxu0
        %v1136 = vadd.f32 0.0, %v1135
        %v1137 = vpop.f32.mrf.mxu0
        %v1138 = vadd.f32 0.0, %v1137
        %1139 = vdwg.mxu0
        %v1140 = vsel %vm310, %v1136, %v1138
        %s1141 = scalar_lea.vmem %s177, 20 [#allocation4]
        %v1142 = vld [vmem:[%s1141] sm:$0xf]
        %v1143 = vadd.f32 %v1142, %v1140
        %v1144 = vxor.u32 %v1143, 2147483648
        %v1145 = vmul.f32 %v1144, 1.442695
        %v1146 = vpow.pop %v1145
        %v1147 = vadd.f32 %v1146, 1.0
        %v1148 = vrcp.pop %v1147
        %v1149 = vmul.f32 1.0, %v1148
        %v1150 = vtanh.pop %v1143
        %v1151 = vld [vmem:[#allocation3] sm:$0xf]
        %1153 = vrot.lane.b32.xlu0 %v1151, 32
        %v1154 = vpop.permute.xlu0 %1153
        %v1156 = vmul.f32 %v1149, %v1154
        %1158 = vrot.lane.b32.xlu0 %v1150, 64
        %v1159 = vpop.permute.xlu0 %1158
        %v1161 = vmul.f32 %v1149, %v1159
        %1163 = vrot.lane.b32.xlu0 %v1161, 32
        %v1164 = vpop.permute.xlu0 %1163
        %v1166 = vadd.f32 %v1156, %v1164
        %v1167 = vtanh.pop %v1166
        %1169 = vrot.lane.b32.xlu0 %v1167, 64
        %v1170 = vpop.permute.xlu0 %1169
        %v1172 = vmul.f32 %v1149, %v1170
        %1174 = vset.pattern.permute.xlu0 0
        %1175 = vperm.xlu0 %1174, %v1056
        %v1176 = vpop.permute.xlu0 %1175
        %v1178 = vmul.f32 %v1176, %v1172
        %v1179 = vsub.f32 1.0, %v1056
        %1181 = vset.pattern.permute.xlu0 0
        %1182 = vperm.xlu0 %1181, %v1179
        %v1183 = vpop.permute.xlu0 %1182
        %v1185 = vmul.f32 %v1183, %v1057
        %1187 = vrot.lane.b32.xlu0 %v1185, 96
        %v1188 = vpop.permute.xlu0 %1187
        %v1190 = vadd.f32 %v1178, %v1188
        %1192 = vrot.lane.b32.xlu0 %v1190, 32
        %v1193 = vpop.permute.xlu0 %1192
        %1195 = vst.msk [vmem:[#allocation2] sm:$0xf] %vm365, %v1193
        %v1196 = vmul.f32 %v1176, %v1166
        %v1197 = vld [vmem:[#allocation3] sm:$0xf]
        %v1198 = vmul.f32 %v1183, %v1197
        %1200 = vrot.lane.b32.xlu0 %v1198, 32
        %v1201 = vpop.permute.xlu0 %1200
        %v1203 = vadd.f32 %v1196, %v1201
        %1205 = vrot.lane.b32.xlu0 %v1203, 96
        %v1206 = vpop.permute.xlu0 %1205
        %1208 = vst.msk [vmem:[#allocation3] sm:$0xf] %vm365, %v1206
        %1210 = vrot.lane.b32.xlu0 %v1178, 32
        %v1211 = vpop.permute.xlu0 %1210
        %s1213 = scalar_lea.vmem %s203, 20 [#allocation9]
        %1214 = vst.msk [vmem:[%s1213] sm:$0xf] %vm365, %v1211
        %s1215 = sadd.s32 %s217, 6
        %s1216 = ssub.s32 9, %s217
        %v1217 = vstv %s1215
        %v1218 = vstv %s1216
        %v1219 = vsel %vm215, %v1217, %v1218
        %vm1220 = vcmp.lt.s32.totalorder %v1219, %v216
        %v1221 = vsel %vm1220, 1, 0
        %v1222 = vcvt.s32.f32 %v1221
        %v1223 = vld [vmem:[#allocation2] sm:$0xf]
        %v1224 = vld [vmem:[#allocation7] sm:$0xff]
        %v1225 = vld [vmem:[#allocation7 + $0x8] sm:$0xff]
        %v1226 = vld [vmem:[#allocation7 + $0x10] sm:$0xff]
        %v1227 = vld [vmem:[#allocation7 + $0x18] sm:$0xff]
        %v1228 = vld [vmem:[#allocation7 + $0x20] sm:$0xff]
        %v1229 = vld [vmem:[#allocation7 + $0x28] sm:$0xff]
        %v1230 = vld [vmem:[#allocation7 + $0x30] sm:$0xff]
        %v1231 = vld [vmem:[#allocation7 + $0x38] sm:$0xff]
        %v1233 = vsel %vm234, %v1223, 0
        %1235 = vmatprep.subr.mxu0 0.0
        %1236 = vmatpush1.msra.mxu0 0.0
        %1237 = vmatprep.subr.mxu0 0.0
        %1238 = vmatpush1.msra.mxu0 0.0
        %1239 = vmatprep.subr.mxu0 0.0
        %1240 = vmatpush1.msra.mxu0 0.0
        %1241 = vmatprep.subr.mxu0 0.0
        %1242 = vmatpush1.msra.mxu0 0.0
        %1243 = vmatprep.subr.mxu0 0.0
        %1244 = vmatpush1.msra.mxu0 0.0
        %1245 = vmatprep.subr.mxu0 0.0
        %1246 = vmatpush1.msra.mxu0 0.0
        %1247 = vmatprep.subr.mxu0 0.0
        %1248 = vmatpush1.msra.mxu0 0.0
        %1249 = vmatprep.subr.mxu0 0.0
        %1250 = vmatpush1.msra.mxu0 0.0
        %1251 = vmatprep.subr.mxu0 0.0
        %1252 = vmatpush1.msra.mxu0 0.0
        %1253 = vmatprep.subr.mxu0 0.0
        %1254 = vmatpush1.msra.mxu0 0.0
        %1255 = vmatprep.subr.mxu0 0.0
        %1256 = vmatpush1.msra.mxu0 0.0
        %1257 = vmatprep.subr.mxu0 0.0
        %1258 = vmatpush1.msra.mxu0 0.0
        %1259 = vmatprep.subr.mxu0 %v1231
        %1260 = vmatpush1.msra.mxu0 %v1230
        %1261 = vmatprep.subr.mxu0 %v1229
        %1262 = vmatpush1.msra.mxu0 %v1228
        %1263 = vmatprep.subr.mxu0 %v1227
        %1264 = vmatpush1.msra.mxu0 %v1226
        %1265 = vmatprep.subr.mxu0 %v1225
        %1266 = vmatpush1.msra.mxu0 %v1224
        %1267 = vmatprep.subr.mxu0 0.0
        %1268 = vmatpush2.msra.mxu0 0.0
        %1269 = vmatprep.subr.mxu0 0.0
        %1270 = vmatpush2.msra.mxu0 0.0
        %1271 = vmatprep.subr.mxu0 0.0
        %1272 = vmatpush2.msra.mxu0 0.0
        %1273 = vmatprep.subr.mxu0 0.0
        %1274 = vmatpush2.msra.mxu0 0.0
        %1275 = vmatprep.subr.mxu0 0.0
        %1276 = vmatpush2.msra.mxu0 0.0
        %1277 = vmatprep.subr.mxu0 0.0
        %1278 = vmatpush2.msra.mxu0 0.0
        %1279 = vmatprep.subr.mxu0 0.0
        %1280 = vmatpush2.msra.mxu0 0.0
        %1281 = vmatprep.subr.mxu0 0.0
        %1282 = vmatpush2.msra.mxu0 0.0
        %1283 = vmatprep.subr.mxu0 0.0
        %1284 = vmatpush2.msra.mxu0 0.0
        %1285 = vmatprep.subr.mxu0 0.0
        %1286 = vmatpush2.msra.mxu0 0.0
        %1287 = vmatprep.subr.mxu0 0.0
        %1288 = vmatpush2.msra.mxu0 0.0
        %1289 = vmatprep.subr.mxu0 0.0
        %1290 = vmatpush2.msra.mxu0 0.0
        %1291 = vmatprep.subr.mxu0 0.0
        %1292 = vmatpush2.msra.mxu0 0.0
        %1293 = vmatprep.subr.mxu0 0.0
        %1294 = vmatpush2.msra.mxu0 0.0
        %1295 = vmatprep.subr.mxu0 0.0
        %1296 = vmatpush2.msra.mxu0 0.0
        %1297 = vmatprep.subr.mxu0 0.0
        %1298 = vmatpush2.msra.mxu0 0.0
        %1299 = vmatprep.mubr.f32.mxu0 0.0
        %1300 = vmatmul.mubr.f32.gmra.mxu0 %v1233
        %v1301 = vpop.f32.mrf.mxu0
        %v1302 = vadd.f32 0.0, %v1301
        %v1303 = vpop.f32.mrf.mxu0
        %v1304 = vadd.f32 0.0, %v1303
        %1305 = vdwg.mxu0
        %v1306 = vsel %vm310, %v1302, %v1304
        %s1307 = scalar_lea.vmem %s177, 24 [#allocation4]
        %v1308 = vld [vmem:[%s1307] sm:$0xf]
        %v1309 = vadd.f32 %v1308, %v1306
        %v1310 = vxor.u32 %v1309, 2147483648
        %v1311 = vmul.f32 %v1310, 1.442695
        %v1312 = vpow.pop %v1311
        %v1313 = vadd.f32 %v1312, 1.0
        %v1314 = vrcp.pop %v1313
        %v1315 = vmul.f32 1.0, %v1314
        %v1316 = vtanh.pop %v1309
        %v1317 = vld [vmem:[#allocation3] sm:$0xf]
        %1319 = vrot.lane.b32.xlu0 %v1317, 32
        %v1320 = vpop.permute.xlu0 %1319
        %v1322 = vmul.f32 %v1315, %v1320
        %1324 = vrot.lane.b32.xlu0 %v1316, 64
        %v1325 = vpop.permute.xlu0 %1324
        %v1327 = vmul.f32 %v1315, %v1325
        %1329 = vrot.lane.b32.xlu0 %v1327, 32
        %v1330 = vpop.permute.xlu0 %1329
        %v1332 = vadd.f32 %v1322, %v1330
        %v1333 = vtanh.pop %v1332
        %1335 = vrot.lane.b32.xlu0 %v1333, 64
        %v1336 = vpop.permute.xlu0 %1335
        %v1338 = vmul.f32 %v1315, %v1336
        %1340 = vset.pattern.permute.xlu0 0
        %1341 = vperm.xlu0 %1340, %v1222
        %v1342 = vpop.permute.xlu0 %1341
        %v1344 = vmul.f32 %v1342, %v1338
        %v1345 = vsub.f32 1.0, %v1222
        %1347 = vset.pattern.permute.xlu0 0
        %1348 = vperm.xlu0 %1347, %v1345
        %v1349 = vpop.permute.xlu0 %1348
        %v1351 = vmul.f32 %v1349, %v1223
        %1353 = vrot.lane.b32.xlu0 %v1351, 96
        %v1354 = vpop.permute.xlu0 %1353
        %v1356 = vadd.f32 %v1344, %v1354
        %1358 = vrot.lane.b32.xlu0 %v1356, 32
        %v1359 = vpop.permute.xlu0 %1358
        %1361 = vst.msk [vmem:[#allocation2] sm:$0xf] %vm365, %v1359
        %v1362 = vmul.f32 %v1342, %v1332
        %v1363 = vld [vmem:[#allocation3] sm:$0xf]
        %v1364 = vmul.f32 %v1349, %v1363
        %1366 = vrot.lane.b32.xlu0 %v1364, 32
        %v1367 = vpop.permute.xlu0 %1366
        %v1369 = vadd.f32 %v1362, %v1367
        %1371 = vrot.lane.b32.xlu0 %v1369, 96
        %v1372 = vpop.permute.xlu0 %1371
        %1374 = vst.msk [vmem:[#allocation3] sm:$0xf] %vm365, %v1372
        %1376 = vrot.lane.b32.xlu0 %v1344, 32
        %v1377 = vpop.permute.xlu0 %1376
        %s1379 = scalar_lea.vmem %s203, 24 [#allocation9]
        %1380 = vst.msk [vmem:[%s1379] sm:$0xf] %vm365, %v1377
        %s1381 = sadd.s32 %s217, 7
        %s1382 = ssub.s32 8, %s217
        %v1383 = vstv %s1381
        %v1384 = vstv %s1382
        %v1385 = vsel %vm215, %v1383, %v1384
        %vm1386 = vcmp.lt.s32.totalorder %v1385, %v216
        %v1387 = vsel %vm1386, 1, 0
        %v1388 = vcvt.s32.f32 %v1387
        %v1389 = vld [vmem:[#allocation2] sm:$0xf]
        %v1390 = vld [vmem:[#allocation7] sm:$0xff]
        %v1391 = vld [vmem:[#allocation7 + $0x8] sm:$0xff]
        %v1392 = vld [vmem:[#allocation7 + $0x10] sm:$0xff]
        %v1393 = vld [vmem:[#allocation7 + $0x18] sm:$0xff]
        %v1394 = vld [vmem:[#allocation7 + $0x20] sm:$0xff]
        %v1395 = vld [vmem:[#allocation7 + $0x28] sm:$0xff]
        %v1396 = vld [vmem:[#allocation7 + $0x30] sm:$0xff]
        %v1397 = vld [vmem:[#allocation7 + $0x38] sm:$0xff]
        %v1399 = vsel %vm234, %v1389, 0
        %1401 = vmatprep.subr.mxu0 0.0
        %1402 = vmatpush1.msra.mxu0 0.0
        %1403 = vmatprep.subr.mxu0 0.0
        %1404 = vmatpush1.msra.mxu0 0.0
        %1405 = vmatprep.subr.mxu0 0.0
        %1406 = vmatpush1.msra.mxu0 0.0
        %1407 = vmatprep.subr.mxu0 0.0
        %1408 = vmatpush1.msra.mxu0 0.0
        %1409 = vmatprep.subr.mxu0 0.0
        %1410 = vmatpush1.msra.mxu0 0.0
        %1411 = vmatprep.subr.mxu0 0.0
        %1412 = vmatpush1.msra.mxu0 0.0
        %1413 = vmatprep.subr.mxu0 0.0
        %1414 = vmatpush1.msra.mxu0 0.0
        %1415 = vmatprep.subr.mxu0 0.0
        %1416 = vmatpush1.msra.mxu0 0.0
        %1417 = vmatprep.subr.mxu0 0.0
        %1418 = vmatpush1.msra.mxu0 0.0
        %1419 = vmatprep.subr.mxu0 0.0
        %1420 = vmatpush1.msra.mxu0 0.0
        %1421 = vmatprep.subr.mxu0 0.0
        %1422 = vmatpush1.msra.mxu0 0.0
        %1423 = vmatprep.subr.mxu0 0.0
        %1424 = vmatpush1.msra.mxu0 0.0
        %1425 = vmatprep.subr.mxu0 %v1397
        %1426 = vmatpush1.msra.mxu0 %v1396
        %1427 = vmatprep.subr.mxu0 %v1395
        %1428 = vmatpush1.msra.mxu0 %v1394
        %1429 = vmatprep.subr.mxu0 %v1393
        %1430 = vmatpush1.msra.mxu0 %v1392
        %1431 = vmatprep.subr.mxu0 %v1391
        %1432 = vmatpush1.msra.mxu0 %v1390
        %1433 = vmatprep.subr.mxu0 0.0
        %1434 = vmatpush2.msra.mxu0 0.0
        %1435 = vmatprep.subr.mxu0 0.0
        %1436 = vmatpush2.msra.mxu0 0.0
        %1437 = vmatprep.subr.mxu0 0.0
        %1438 = vmatpush2.msra.mxu0 0.0
        %1439 = vmatprep.subr.mxu0 0.0
        %1440 = vmatpush2.msra.mxu0 0.0
        %1441 = vmatprep.subr.mxu0 0.0
        %1442 = vmatpush2.msra.mxu0 0.0
        %1443 = vmatprep.subr.mxu0 0.0
        %1444 = vmatpush2.msra.mxu0 0.0
        %1445 = vmatprep.subr.mxu0 0.0
        %1446 = vmatpush2.msra.mxu0 0.0
        %1447 = vmatprep.subr.mxu0 0.0
        %1448 = vmatpush2.msra.mxu0 0.0
        %1449 = vmatprep.subr.mxu0 0.0
        %1450 = vmatpush2.msra.mxu0 0.0
        %1451 = vmatprep.subr.mxu0 0.0
        %1452 = vmatpush2.msra.mxu0 0.0
        %1453 = vmatprep.subr.mxu0 0.0
        %1454 = vmatpush2.msra.mxu0 0.0
        %1455 = vmatprep.subr.mxu0 0.0
        %1456 = vmatpush2.msra.mxu0 0.0
        %1457 = vmatprep.subr.mxu0 0.0
        %1458 = vmatpush2.msra.mxu0 0.0
        %1459 = vmatprep.subr.mxu0 0.0
        %1460 = vmatpush2.msra.mxu0 0.0
        %1461 = vmatprep.subr.mxu0 0.0
        %1462 = vmatpush2.msra.mxu0 0.0
        %1463 = vmatprep.subr.mxu0 0.0
        %1464 = vmatpush2.msra.mxu0 0.0
        %1465 = vmatprep.mubr.f32.mxu0 0.0
        %1466 = vmatmul.mubr.f32.gmra.mxu0 %v1399
        %v1467 = vpop.f32.mrf.mxu0
        %v1468 = vadd.f32 0.0, %v1467
        %v1469 = vpop.f32.mrf.mxu0
        %v1470 = vadd.f32 0.0, %v1469
        %1471 = vdwg.mxu0
        %v1472 = vsel %vm310, %v1468, %v1470
        %s1473 = scalar_lea.vmem %s177, 28 [#allocation4]
        %v1474 = vld [vmem:[%s1473] sm:$0xf]
        %v1475 = vadd.f32 %v1474, %v1472
        %v1476 = vxor.u32 %v1475, 2147483648
        %v1477 = vmul.f32 %v1476, 1.442695
        %v1478 = vpow.pop %v1477
        %v1479 = vadd.f32 %v1478, 1.0
        %v1480 = vrcp.pop %v1479
        %v1481 = vmul.f32 1.0, %v1480
        %v1482 = vtanh.pop %v1475
        %v1483 = vld [vmem:[#allocation3] sm:$0xf]
        %1485 = vrot.lane.b32.xlu0 %v1483, 32
        %v1486 = vpop.permute.xlu0 %1485
        %v1488 = vmul.f32 %v1481, %v1486
        %1490 = vrot.lane.b32.xlu0 %v1482, 64
        %v1491 = vpop.permute.xlu0 %1490
        %v1493 = vmul.f32 %v1481, %v1491
        %1495 = vrot.lane.b32.xlu0 %v1493, 32
        %v1496 = vpop.permute.xlu0 %1495
        %v1498 = vadd.f32 %v1488, %v1496
        %v1499 = vtanh.pop %v1498
        %1501 = vrot.lane.b32.xlu0 %v1499, 64
        %v1502 = vpop.permute.xlu0 %1501
        %v1504 = vmul.f32 %v1481, %v1502
        %1506 = vset.pattern.permute.xlu0 0
        %1507 = vperm.xlu0 %1506, %v1388
        %v1508 = vpop.permute.xlu0 %1507
        %v1510 = vmul.f32 %v1508, %v1504
        %v1511 = vsub.f32 1.0, %v1388
        %1513 = vset.pattern.permute.xlu0 0
        %1514 = vperm.xlu0 %1513, %v1511
        %v1515 = vpop.permute.xlu0 %1514
        %v1517 = vmul.f32 %v1515, %v1389
        %1519 = vrot.lane.b32.xlu0 %v1517, 96
        %v1520 = vpop.permute.xlu0 %1519
        %v1522 = vadd.f32 %v1510, %v1520
        %1524 = vrot.lane.b32.xlu0 %v1522, 32
        %v1525 = vpop.permute.xlu0 %1524
        %1527 = vst.msk [vmem:[#allocation2] sm:$0xf] %vm365, %v1525
        %v1528 = vmul.f32 %v1508, %v1498
        %v1529 = vld [vmem:[#allocation3] sm:$0xf]
        %v1530 = vmul.f32 %v1515, %v1529
        %1532 = vrot.lane.b32.xlu0 %v1530, 32
        %v1533 = vpop.permute.xlu0 %1532
        %v1535 = vadd.f32 %v1528, %v1533
        %1537 = vrot.lane.b32.xlu0 %v1535, 96
        %v1538 = vpop.permute.xlu0 %1537
        %1540 = vst.msk [vmem:[#allocation3] sm:$0xf] %vm365, %v1538
        %1542 = vrot.lane.b32.xlu0 %v1510, 32
        %v1543 = vpop.permute.xlu0 %1542
        %s1545 = scalar_lea.vmem %s203, 28 [#allocation9]
        %1546 = vst.msk [vmem:[%s1545] sm:$0xf] %vm365, %v1543
        %s1547 = sand.u32 %s97, 1
        %s1548 = scalar_lea.sflag [#allocation6], %s1547
        %s1549 = sand.u32 %s97, 1
        %s1550 = smul.addr %s1549, 32
        %s1551 = scalar_lea.vmem [#allocation9], %s1550
        // Predicated region
        $region45: #{tpu_custom_call.1} parent=31 // pred_check
          %p1552 = pneg %p107
        $region46: #{tpu_custom_call.1} parent=31 // pred_check_branch
          %1554 = sbr.rel (%p1552) target = $region48
        $region47: #{tpu_custom_call.1} parent=31 // pred_region
          %s1555 = smul.u32 8, %s21
          %s1557 = ssub.s32 512, 512
          %1558 = vsyncadd %s1548, %s1557
          %s1559 = smul.addr %s1555, 64
          %s1560 = scalar_lea.hbm %s3, %s1559
          %s1561 = sshll.u32 %s1551, 4
          %s1562 = int_to_ptr.vmem [resolvable:$true] %s1561
          %1567 = dma.vmem_to_hbm [thread:$0]  %s1562, 512, %s1560, %s1548, 64, 64, 4
        $region48: #{tpu_custom_call.1} parent=31 // pred_fallthru
          _
      $region32: #{tpu_custom_call.1} parent=5 // pred_fallthru
        _
      %p1568 = scmp.le.s32.totalorder 2, %s16
      // Predicated region
      $region49: #{tpu_custom_call.1} parent=5 // pred_check
        %p1569 = pneg %p1568
      $region50: #{tpu_custom_call.1} parent=5 // pred_check_branch
        %1571 = sbr.rel (%p1569) target = $region52
      $region51: #{tpu_custom_call.1} parent=5 // pred_region
        %s1572 = ssub.s32 %s16, 2
        // Predicated region
        $region53: #{tpu_custom_call.1} parent=51 // pred_check
          %p1573 = pneg %p113
        $region54: #{tpu_custom_call.1} parent=51 // pred_check_branch
          %1575 = sbr.rel (%p1573) target = $region56
        $region55: #{tpu_custom_call.1} parent=51 // pred_region
          %s1576 = sand.u32 %s98, 1
          %s1577 = scalar_lea.sflag [#allocation6], %s1576
          %s1578 = sand.u32 %s98, 1
          %s1579 = smul.addr %s1578, 32
          %s1580 = scalar_lea.vmem [#allocation9], %s1579
          %1581 = dma.done %s1577, 512
        $region56: #{tpu_custom_call.1} parent=51 // pred_fallthru
          _
      $region52: #{tpu_custom_call.1} parent=5 // pred_fallthru
        _
    $region6: #{tpu_custom_call.1} parent=1 // loop_footer
      %s20 = sadd.s32 1, %s16
    $region7: #{tpu_custom_call.1} parent=1 // loop_footer_branch
      %15 = sbr.rel target = $region3
    $region8: #{tpu_custom_call.1} parent=1 // loop_exit
      _
    %1582 = vsyncpa [#allocation5], 1
    %s1583 = scalar_lea.sflag [#allocation5], 1
    %1584 = vsyncpa %s1583, 1
    %1585 = vsyncpa [#allocation8], 1
    %1586 = vsyncpa [#allocation6], 1
    %s1587 = scalar_lea.sflag [#allocation6], 1
    %1588 = vsyncpa %s1587, 1

</llo_original>
